<compile_context>
chip_gen: v6e
topology: v6e:2x2x1
jax: 0.10.0
libtpu: 0.0.40
codegen_flags: <defaults>
</compile_context>

<pallas_src>
import functools

import jax
import jax.numpy as jnp
from jax.experimental import pallas as pl
from jax.experimental.pallas import tpu as pltpu


# ----------------------------------------------------------------------------
# One-time weight preparation (hoisted out of the per-step call).
# ----------------------------------------------------------------------------
def prepare_gru_weights(W_x, W_h, b):
    """Fuse + cast the GRU parameters once.

    Returns (wx_f, wh_zr, wh_n, b_f):
      wx_f : (x_size, 3H) bf16 = [Wx_z | Wx_r | Wx_n]
      wh_zr: (H, 2H)      bf16 = [Wh_z | Wh_r]
      wh_n : (H, H)       bf16 = Wh_n
      b_f  : (1, 3H)      f32  = [b_z | b_r | b_n]

    Call ONCE outside any scan / time loop: the concat + bf16 cast re-reads all
    f32 weights from HBM, so doing it per step would double weight traffic.
    """
    wx_f = jnp.concatenate([W_x[0], W_x[1], W_x[2]], axis=1).astype(jnp.bfloat16)
    wh_zr = jnp.concatenate([W_h[0], W_h[1]], axis=1).astype(jnp.bfloat16)
    wh_n = W_h[2].astype(jnp.bfloat16)
    b_f = jnp.concatenate([b[0], b[1], b[2]], axis=1).astype(jnp.float32)
    return wx_f, wh_zr, wh_n, b_f


# ----------------------------------------------------------------------------
# Shared in-kernel gate math (bf16 MXU operands, f32 accumulate/elementwise).
# ----------------------------------------------------------------------------
def _gru_gate_math(H, x_bf, h_f32, wx_ref, whzr_ref, whn_ref, b_ref):
    # Fused x-side matmul: (bm, x_size) @ (x_size, 3H) -> [z_x | r_x | n_x]
    # with the fused bias row folded in (single broadcast add).
    gx = jnp.dot(x_bf, wx_ref[...], preferred_element_type=jnp.float32) + b_ref[...]
    # Fused h-side z/r matmul: (bm, H) @ (H, 2H) -> [z_h | r_h]
    gh = jnp.dot(h_f32.astype(jnp.bfloat16), whzr_ref[...],
                 preferred_element_type=jnp.float32)

    z = jax.nn.sigmoid(gx[:, :H] + gh[:, :H])
    r = jax.nn.sigmoid(gx[:, H:2 * H] + gh[:, H:2 * H])

    # Data-dependent matmul: (r * h) @ Wh_n (cannot be fused with the others).
    rn = jnp.dot((r * h_f32).astype(jnp.bfloat16), whn_ref[...],
                 preferred_element_type=jnp.float32)
    n = jnp.tanh(gx[:, 2 * H:] + rn)

    # h' = z*h + (1-z)*n == n + z*(h - n)   (one fewer VPU multiply)
    return n + z * (h_f32 - n)


# ----------------------------------------------------------------------------
# Helpers: batch-tile choice, VMEM budget, cost estimate.
# ----------------------------------------------------------------------------
def _pick_bm(B):
    """Batch tile: whole batch when small (single grid step), else a tile that
    fills the MXU M dimension and the bf16 (16, 128) sublane tile."""
    if B <= 256:
        return B
    for cand in (256, 128, 64, 32, 16):
        if B % cand == 0:
            return cand
    return B  # odd batch: take it as one (padded) block


def _maybe_vmem_limit(bm, x_size, h_size):
    """Only override the compiler's default scoped VMEM when a large-H config
    actually needs it (v6e default 32 MiB, v5e 16 MiB, v7x physical 64 MiB)."""
    weight_bytes = 2 * (2 * (3 * x_size * h_size + 3 * h_size * h_size)
                        + 4 * 3 * h_size)          # assume double-buffered worst case
    act_bytes = 2 * (bm * x_size * 2 + 2 * bm * h_size * 4) + bm * h_size * 4
    est = weight_bytes + act_bytes + (2 << 20)
    if est <= 24 * 1024 * 1024:
        return None  # default limit is plenty; don't touch it
    # TODO(synk): for very large H on v7x (64 MiB physical VMEM), N-tile the
    # fused weight columns (extra grid axis over 3H) instead of only raising
    # the limit, and single-buffer the constant-index weight blocks.
    return min(est, 64 * 1024 * 1024)


def _gru_cost(B, x_size, h_size, T=1):
    flops = 2 * T * B * (3 * x_size * h_size + 3 * h_size * h_size)
    transcendentals = 3 * T * B * h_size
    weight_bytes = 2 * (3 * x_size * h_size + 3 * h_size * h_size) + 4 * 3 * h_size
    act_bytes = T * B * x_size * 2 + 2 * B * h_size * 4
    return pl.CostEstimate(flops=flops, transcendentals=transcendentals,
                           bytes_accessed=weight_bytes + act_bytes)


# ----------------------------------------------------------------------------
# Single-step kernel (matches the PyTorch module's forward exactly).
# ----------------------------------------------------------------------------
def _gru_step_kernel(h_size, x_ref, h_ref, wx_ref, whzr_ref, whn_ref, b_ref,
                     out_ref):
    out_ref[...] = _gru_gate_math(h_size, x_ref[...], h_ref[...],
                                  wx_ref, whzr_ref, whn_ref, b_ref)


def gru_forward(x, old_h, weights, *, bm=None):
    """Single GRU step. x:(B,x_size) f32, old_h:(B,H) f32,
    weights = prepare_gru_weights(W_x, W_h, b). Returns new_h:(B,H) f32."""
    wx_f, wh_zr, wh_n, b_f = weights
    B, x_size = x.shape
    h_size = wh_n.shape[-1]
    assert x_size % 128 == 0 and h_size % 128 == 0, "lane-aligned feature dims"

    if bm is None:
        bm = _pick_bm(B)
    assert bm == B or (B % bm == 0 and bm % 16 == 0), \
        "batch tile must divide B and be a multiple of 16 (bf16 sublane tile)"

    x_bf = x.astype(jnp.bfloat16)
    kernel = functools.partial(_gru_step_kernel, h_size)

    return pl.pallas_call(
        kernel,
        out_shape=jax.ShapeDtypeStruct((B, h_size), jnp.float32),
        grid_spec=pltpu.PrefetchScalarGridSpec(
            num_scalar_prefetch=0,
            grid=(B // bm,),
            in_specs=[
                # batch-tiled, pipelined activations
                pl.BlockSpec((bm, x_size), lambda i: (i, 0)),
                pl.BlockSpec((bm, h_size), lambda i: (i, 0)),
                # weights / bias: constant block index -> VMEM-resident
                pl.BlockSpec((x_size, 3 * h_size), lambda i: (0, 0)),
                pl.BlockSpec((h_size, 2 * h_size), lambda i: (0, 0)),
                pl.BlockSpec((h_size, h_size), lambda i: (0, 0)),
                pl.BlockSpec((1, 3 * h_size), lambda i: (0, 0)),
            ],
            out_specs=pl.BlockSpec((bm, h_size), lambda i: (i, 0)),
        ),
        # new_h can reuse old_h's buffer when the caller donates it
        # (otherwise XLA inserts a copy -- still correct).
        input_output_aliases={1: 0},
        compiler_params=pltpu.CompilerParams(
            dimension_semantics=("parallel",),   # distinct output tile per step
            vmem_limit_bytes=_maybe_vmem_limit(bm, x_size, h_size)),
        cost_estimate=_gru_cost(B, x_size, h_size),
    )(x_bf, old_h, wx_f, wh_zr, wh_n, b_f)


# ----------------------------------------------------------------------------
# T-step recurrence inside ONE pallas_call: weights stay resident, h carried
# in VMEM scratch, only x_t streamed in and the final h written out.
# ----------------------------------------------------------------------------
def _gru_seq_kernel(h_size, x_ref, h0_ref, wx_ref, whzr_ref, whn_ref, b_ref,
                    hT_ref, h_vmem):
    @pl.when(pl.program_id(0) == 0)
    def _():
        h_vmem[...] = h0_ref[...]

    h_new = _gru_gate_math(h_size, x_ref[...], h_vmem[...],
                           wx_ref, whzr_ref, whn_ref, b_ref)
    h_vmem[...] = h_new      # carry to next grid step
    hT_ref[...] = h_new      # resident output block; HBM writeback at the end


def gru_sequence(xs, h0, weights):
    """Run T GRU steps. xs:(T,B,x_size) f32, h0:(B,H) f32. Returns h_T:(B,H)."""
    wx_f, wh_zr, wh_n, b_f = weights
    T, B, x_size = xs.shape
    h_size = wh_n.shape[-1]
    assert x_size % 128 == 0 and h_size % 128 == 0, "lane-aligned feature dims"
    # TODO(synk): for very large B, add a batch grid axis ("parallel") around
    # the time axis so each core carries its own h tile.

    xs_bf = xs.astype(jnp.bfloat16)
    kernel = functools.partial(_gru_seq_kernel, h_size)

    return pl.pallas_call(
        kernel,
        out_shape=jax.ShapeDtypeStruct((B, h_size), jnp.float32),
        grid_spec=pltpu.PrefetchScalarGridSpec(
            num_scalar_prefetch=0,
            grid=(T,),
            in_specs=[
                # per-step input slab (time dim squeezed out of the kernel Ref)
                pl.BlockSpec((None, B, x_size), lambda t: (t, 0, 0)),
                # initial state + weights: constant index -> fetched once
                pl.BlockSpec((B, h_size), lambda t: (0, 0)),
                pl.BlockSpec((x_size, 3 * h_size), lambda t: (0, 0)),
                pl.BlockSpec((h_size, 2 * h_size), lambda t: (0, 0)),
                pl.BlockSpec((h_size, h_size), lambda t: (0, 0)),
                pl.BlockSpec((1, 3 * h_size), lambda t: (0, 0)),
            ],
            out_specs=pl.BlockSpec((B, h_size), lambda t: (0, 0)),
            scratch_shapes=[pltpu.VMEM((B, h_size), jnp.float32)],
        ),
        compiler_params=pltpu.CompilerParams(
            dimension_semantics=("arbitrary",),  # sequential carry over time
            vmem_limit_bytes=_maybe_vmem_limit(B, x_size, h_size)),
        cost_estimate=_gru_cost(B, x_size, h_size, T=T),
    )(xs_bf, h0, wx_f, wh_zr, wh_n, b_f)


# ----------------------------------------------------------------------------
# Pure-JAX f32 reference with the module's exact (Cho) semantics.
# ----------------------------------------------------------------------------
def gru_reference(x, old_h, W_x, W_h, b):
    z = jax.nn.sigmoid(x @ W_x[0] + old_h @ W_h[0] + b[0])
    r = jax.nn.sigmoid(x @ W_x[1] + old_h @ W_h[1] + b[1])
    n = jnp.tanh(x @ W_x[2] + (r * old_h) @ W_h[2] + b[2])
    return z * old_h + (1.0 - z) * n


if __name__ == "__main__":
    # Module default feature sizes (256, lane-aligned); small batch / sequence.
    B, x_size, h_size, T = 16, 256, 256, 8

    key = jax.random.PRNGKey(0)
    kx, kh, kwx, kwh, kb, ks = jax.random.split(key, 6)
    std = 1.0 / jnp.sqrt(jnp.float32(h_size))
    x = jax.random.normal(kx, (B, x_size), jnp.float32)
    old_h = jax.random.normal(kh, (B, h_size), jnp.float32)
    W_x = jax.random.normal(kwx, (3, x_size, h_size), jnp.float32) * std
    W_h = jax.random.normal(kwh, (3, h_size, h_size), jnp.float32) * std
    b = jax.random.normal(kb, (3, 1, h_size), jnp.float32) * 0.1

    weights = prepare_gru_weights(W_x, W_h, b)   # one-time fusion + bf16 cast

    # ---- single step (matches the PyTorch module's forward) ----
    ref = gru_reference(x, old_h, W_x, W_h, b)   # compute before (aliasing)
    new_h = jax.block_until_ready(gru_forward(x, old_h, weights))
    assert new_h.shape == (B, h_size) and new_h.dtype == jnp.float32
    # bf16 matmul operands with f32 accumulation: loosened tolerance vs f32 ref.
    assert jnp.allclose(new_h, ref, atol=5e-2, rtol=5e-2), "step mismatch"

    # ---- T steps in one pallas_call (weights resident, h in VMEM scratch) ----
    xs = jax.random.normal(ks, (T, B, x_size), jnp.float32)
    ref_h = old_h
    for t in range(T):
        ref_h = gru_reference(xs[t], ref_h, W_x, W_h, b)
    h_T = jax.block_until_ready(gru_sequence(xs, old_h, weights))
    assert h_T.shape == (B, h_size) and h_T.dtype == jnp.float32
    assert jnp.allclose(h_T, ref_h, atol=1e-1, rtol=1e-1), "sequence mismatch"

    print("KERNEL_OK")
</pallas_src>

<mosaic_0001>
module attributes {stable_mosaic.version = 11 : i64} {
  func.func @_gru_step_kernel(%arg0: i32, %arg1: memref<16x256xbf16, #tpu.memory_space<vmem>>, %arg2: memref<16x256xf32, #tpu.memory_space<vmem>>, %arg3: memref<256x768xbf16, #tpu.memory_space<vmem>>, %arg4: memref<256x512xbf16, #tpu.memory_space<vmem>>, %arg5: memref<256x256xbf16, #tpu.memory_space<vmem>>, %arg6: memref<1x768xf32, #tpu.memory_space<vmem>>, %arg7: memref<16x256xf32, #tpu.memory_space<vmem>>) attributes {dimension_semantics = [#tpu.dimension_semantics<parallel>], iteration_bounds = array<i64: 1>, scalar_prefetch = 0 : i64, scratch_operands = 0 : i64, tpu.core_type = #tpu.core_type<tc>, window_params = [{transform_indices = @transform_0, window_bounds = array<i64: 16, 256>}, {transform_indices = @transform_1, window_bounds = array<i64: 16, 256>}, {pipeline_mode = #tpu.pipeline_mode<synchronous>, transform_indices = @transform_2, window_bounds = array<i64: 256, 768>}, {pipeline_mode = #tpu.pipeline_mode<synchronous>, transform_indices = @transform_3, window_bounds = array<i64: 256, 512>}, {pipeline_mode = #tpu.pipeline_mode<synchronous>, transform_indices = @transform_4, window_bounds = array<i64: 256, 256>}, {pipeline_mode = #tpu.pipeline_mode<synchronous>, transform_indices = @transform_5, window_bounds = array<i64: 1, 768>}, {transform_indices = @transform_6, window_bounds = array<i64: 16, 256>}]} {
    %c0 = arith.constant 0 : index
    %c0_0 = arith.constant 0 : index
    %0 = vector.load %arg1[%c0, %c0_0] : memref<16x256xbf16, #tpu.memory_space<vmem>>, vector<16x256xbf16>
    %c0_1 = arith.constant 0 : index
    %c0_2 = arith.constant 0 : index
    %1 = vector.load %arg2[%c0_1, %c0_2] : memref<16x256xf32, #tpu.memory_space<vmem>>, vector<16x256xf32>
    %c0_3 = arith.constant 0 : index
    %c0_4 = arith.constant 0 : index
    %2 = vector.load %arg3[%c0_3, %c0_4] : memref<256x768xbf16, #tpu.memory_space<vmem>>, vector<256x768xbf16>
    %cst = arith.constant dense<0.000000e+00> : vector<16x768xf32>
    %3 = tpu.matmul %0, %2, %cst {dimension_numbers = #tpu.dot_dimension_numbers<[1], [0], [0], [1], [0, 0, 1, 1], [], []>} : vector<16x256xbf16>, vector<256x768xbf16>, vector<16x768xf32> -> vector<16x768xf32>
    %c0_5 = arith.constant 0 : index
    %c0_6 = arith.constant 0 : index
    %4 = vector.load %arg6[%c0_5, %c0_6] : memref<1x768xf32, #tpu.memory_space<vmem>>, vector<1x768xf32>
    %5 = vector.broadcast %4 : vector<1x768xf32> to vector<16x768xf32>
    %6 = arith.addf %3, %5 : vector<16x768xf32>
    %7 = arith.truncf %1 : vector<16x256xf32> to vector<16x256xbf16>
    %c0_7 = arith.constant 0 : index
    %c0_8 = arith.constant 0 : index
    %8 = vector.load %arg4[%c0_7, %c0_8] : memref<256x512xbf16, #tpu.memory_space<vmem>>, vector<256x512xbf16>
    %cst_9 = arith.constant dense<0.000000e+00> : vector<16x512xf32>
    %9 = tpu.matmul %7, %8, %cst_9 {dimension_numbers = #tpu.dot_dimension_numbers<[1], [0], [0], [1], [0, 0, 1, 1], [], []>} : vector<16x256xbf16>, vector<256x512xbf16>, vector<16x512xf32> -> vector<16x512xf32>
    %10 = vector.extract_strided_slice %6 {offsets = [0, 0], sizes = [16, 256], strides = [1, 1]} : vector<16x768xf32> to vector<16x256xf32>
    %11 = vector.extract_strided_slice %9 {offsets = [0, 0], sizes = [16, 256], strides = [1, 1]} : vector<16x512xf32> to vector<16x256xf32>
    %12 = arith.addf %10, %11 : vector<16x256xf32>
    %13 = arith.negf %12 : vector<16x256xf32>
    %14 = math.exp %13 : vector<16x256xf32>
    %cst_10 = arith.constant 1.000000e+00 : f32
    %15 = vector.broadcast %cst_10 : f32 to vector<16x256xf32>
    %16 = arith.addf %15, %14 : vector<16x256xf32>
    %17 = arith.divf %15, %16 : vector<16x256xf32>
    %18 = vector.extract_strided_slice %6 {offsets = [0, 256], sizes = [16, 256], strides = [1, 1]} : vector<16x768xf32> to vector<16x256xf32>
    %19 = vector.extract_strided_slice %9 {offsets = [0, 256], sizes = [16, 256], strides = [1, 1]} : vector<16x512xf32> to vector<16x256xf32>
    %20 = arith.addf %18, %19 : vector<16x256xf32>
    %21 = arith.negf %20 : vector<16x256xf32>
    %22 = math.exp %21 : vector<16x256xf32>
    %cst_11 = arith.constant 1.000000e+00 : f32
    %23 = vector.broadcast %cst_11 : f32 to vector<16x256xf32>
    %24 = arith.addf %23, %22 : vector<16x256xf32>
    %25 = arith.divf %23, %24 : vector<16x256xf32>
    %26 = arith.mulf %25, %1 : vector<16x256xf32>
    %27 = arith.truncf %26 : vector<16x256xf32> to vector<16x256xbf16>
    %c0_12 = arith.constant 0 : index
    %c0_13 = arith.constant 0 : index
    %28 = vector.load %arg5[%c0_12, %c0_13] : memref<256x256xbf16, #tpu.memory_space<vmem>>, vector<256x256xbf16>
    %cst_14 = arith.constant dense<0.000000e+00> : vector<16x256xf32>
    %29 = tpu.matmul %27, %28, %cst_14 {dimension_numbers = #tpu.dot_dimension_numbers<[1], [0], [0], [1], [0, 0, 1, 1], [], []>} : vector<16x256xbf16>, vector<256x256xbf16>, vector<16x256xf32> -> vector<16x256xf32>
    %30 = vector.extract_strided_slice %6 {offsets = [0, 512], sizes = [16, 256], strides = [1, 1]} : vector<16x768xf32> to vector<16x256xf32>
    %31 = arith.addf %30, %29 : vector<16x256xf32>
    %32 = math.tanh %31 : vector<16x256xf32>
    %33 = arith.subf %1, %32 : vector<16x256xf32>
    %34 = arith.mulf %17, %33 : vector<16x256xf32>
    %35 = arith.addf %32, %34 : vector<16x256xf32>
    %c0_15 = arith.constant 0 : index
    %c0_16 = arith.constant 0 : index
    %36 = vector.load %arg7[%c0_15, %c0_16] : memref<16x256xf32, #tpu.memory_space<vmem>>, vector<16x256xf32>
    tpu.vector_store %arg7[%c0_15, %c0_16], %35 {strides = array<i32>} : memref<16x256xf32, #tpu.memory_space<vmem>>, vector<16x256xf32>,
    return
  }
  func.func @transform_0(%arg0: i32) -> (i32, i32) {
    %c0_i32 = arith.constant 0 : i32
    %c0_i32_0 = arith.constant 0 : i32
    return %arg0, %c0_i32 : i32, i32
  }
  func.func @transform_1(%arg0: i32) -> (i32, i32) {
    %c0_i32 = arith.constant 0 : i32
    %c0_i32_0 = arith.constant 0 : i32
    return %arg0, %c0_i32 : i32, i32
  }
  func.func @transform_2(%arg0: i32) -> (i32, i32) {
    %c0_i32 = arith.constant 0 : i32
    %c0_i32_0 = arith.constant 0 : i32
    %c0_i32_1 = arith.constant 0 : i32
    return %c0_i32, %c0_i32_0 : i32, i32
  }
  func.func @transform_3(%arg0: i32) -> (i32, i32) {
    %c0_i32 = arith.constant 0 : i32
    %c0_i32_0 = arith.constant 0 : i32
    %c0_i32_1 = arith.constant 0 : i32
    return %c0_i32, %c0_i32_0 : i32, i32
  }
  func.func @transform_4(%arg0: i32) -> (i32, i32) {
    %c0_i32 = arith.constant 0 : i32
    %c0_i32_0 = arith.constant 0 : i32
    %c0_i32_1 = arith.constant 0 : i32
    return %c0_i32, %c0_i32_0 : i32, i32
  }
  func.func @transform_5(%arg0: i32) -> (i32, i32) {
    %c0_i32 = arith.constant 0 : i32
    %c0_i32_0 = arith.constant 0 : i32
    %c0_i32_1 = arith.constant 0 : i32
    return %c0_i32, %c0_i32_0 : i32, i32
  }
  func.func @transform_6(%arg0: i32) -> (i32, i32) {
    %c0_i32 = arith.constant 0 : i32
    %c0_i32_0 = arith.constant 0 : i32
    return %arg0, %c0_i32 : i32, i32
  }
}

</mosaic_0001>

<llo_original>
// kernel: tpu_custom_call.1
$region0: #{tpu_custom_call.1}
  #allocation0 [shape = 'u32[]', space=smem, size = 0x4, offset = 0x4, fixed_abs, tag = 'smem constant byte address 0x4 - core index']
  #allocation1 [shape = 'u32[144,128]{1,0:T(1,128)}', space=vmem, size = 0x12000, scoped, tag = 'internal scratch']
  %s0 = inlined_call_operand.vmem [shape: bf16[16,256], index: 0, kind: input, shape index: {}]
  %s1 = inlined_call_operand.hbm [shape: f32[16,256], index: 1, kind: input, shape index: {}, may-alias: {1,6}]
  %s2 = inlined_call_operand.hbm [shape: bf16[256,768], index: 2, kind: input, shape index: {}]
  %s3 = inlined_call_operand.hbm [shape: bf16[256,512], index: 3, kind: input, shape index: {}]
  %s4 = inlined_call_operand.hbm [shape: bf16[256,256], index: 4, kind: input, shape index: {}]
  %s5 = inlined_call_operand.vmem [shape: f32[1,768], index: 5, kind: input, shape index: {}]
  %s6 = inlined_call_operand.hbm [shape: f32[16,256], index: 6, kind: output, shape index: {}, may-alias: {1,6}]
  %s7 = sld [smem:[#allocation0]]
  $region50: #{tpu_custom_call.1} parent=0
    _
  %s9 = ssub.s32 1, %s7
  %s10 = scalar_select 0, %s9, %s7
  $region1: #{tpu_custom_call.1} parent=0
    #allocation2 [shape = 'u8[16384]{0}', space=vmem, size = 0x4000, scoped, tag = 'input window, operand 1, single buffered']
    #allocation3 [shape = 's32[1]{0}', space=sflag, size = 0x4, scoped, tag = 'scoped memory for tpu_custom_call.1']
    #allocation4 [shape = 's32[1]{0}', space=sflag, size = 0x4, scoped, tag = 'scoped memory for tpu_custom_call.1']
    #allocation5 [shape = 'u8[393216]{0}', space=vmem, size = 0x60000, scoped, tag = 'input window, operand 2, single buffered']
    #allocation6 [shape = 's32[1]{0}', space=sflag, size = 0x4, scoped, tag = 'scoped memory for tpu_custom_call.1']
    #allocation7 [shape = 'u8[262144]{0}', space=vmem, size = 0x40000, scoped, tag = 'input window, operand 3, single buffered']
    #allocation8 [shape = 'u8[131072]{0}', space=vmem, size = 0x20000, scoped, tag = 'input window, operand 4, single buffered']
    #allocation9 [shape = 's32[1]{0}', space=sflag, size = 0x4, scoped, tag = 'scoped memory for tpu_custom_call.1']
    #allocation10 [shape = 'u8[16384]{0}', space=vmem, size = 0x4000, scoped, tag = 'output window, operand 0, single buffered']
    %11 = vsyncpa [#allocation3], 0
    %12 = vsyncpa [#allocation6], 0
    %13 = vsyncpa [#allocation9], 0
    %14 = vsyncpa [#allocation4], 0
    // Predicated region
    $region2: #{tpu_custom_call.1} parent=1 // pred_check
      _
    $region3: #{tpu_custom_call.1} parent=1 // pred_check_branch
      %16 = sbr.rel (0) target = $region5
    $region4: #{tpu_custom_call.1} parent=1 // pred_region
      _
    $region5: #{tpu_custom_call.1} parent=1 // pred_fallthru
      _
    // Predicated region
    $region6: #{tpu_custom_call.1} parent=1 // pred_check
      _
    $region7: #{tpu_custom_call.1} parent=1 // pred_check_branch
      %18 = sbr.rel (0) target = $region9
    $region8: #{tpu_custom_call.1} parent=1 // pred_region
      %s20 = ssub.s32 512, 512
      %21 = vsyncadd [#allocation3], %s20
      %s22 = sshll.u32 [#allocation2], 4
      %s23 = int_to_ptr.vmem [resolvable:$true] %s22
      %28 = dma.hbm_to_vmem [thread:$0]  %s1, 512, %s23, [#allocation3], 256, 256, 16
    $region9: #{tpu_custom_call.1} parent=1 // pred_fallthru
      _
    // Predicated region
    $region10: #{tpu_custom_call.1} parent=1 // pred_check
      _
    $region11: #{tpu_custom_call.1} parent=1 // pred_check_branch
      %30 = sbr.rel (0) target = $region13
    $region12: #{tpu_custom_call.1} parent=1 // pred_region
      %s32 = ssub.s32 12288, 12288
      %33 = vsyncadd [#allocation6], %s32
      %s34 = sshll.u32 [#allocation5], 4
      %s35 = int_to_ptr.vmem [resolvable:$true] %s34
      %40 = dma.hbm_to_vmem [thread:$0]  %s2, 12288, %s35, [#allocation6], 384, 384, 24
    $region13: #{tpu_custom_call.1} parent=1 // pred_fallthru
      _
    // Predicated region
    $region14: #{tpu_custom_call.1} parent=1 // pred_check
      _
    $region15: #{tpu_custom_call.1} parent=1 // pred_check_branch
      %42 = sbr.rel (0) target = $region17
    $region16: #{tpu_custom_call.1} parent=1 // pred_region
      %s44 = ssub.s32 8192, 8192
      %45 = vsyncadd [#allocation6], %s44
      %s46 = sshll.u32 [#allocation7], 4
      %s47 = int_to_ptr.vmem [resolvable:$true] %s46
      %52 = dma.hbm_to_vmem [thread:$0]  %s3, 8192, %s47, [#allocation6], 256, 256, 16
    $region17: #{tpu_custom_call.1} parent=1 // pred_fallthru
      _
    // Predicated region
    $region18: #{tpu_custom_call.1} parent=1 // pred_check
      _
    $region19: #{tpu_custom_call.1} parent=1 // pred_check_branch
      %54 = sbr.rel (0) target = $region21
    $region20: #{tpu_custom_call.1} parent=1 // pred_region
      %s56 = ssub.s32 4096, 4096
      %57 = vsyncadd [#allocation9], %s56
      %s58 = sshll.u32 [#allocation8], 4
      %s59 = int_to_ptr.vmem [resolvable:$true] %s58
      %64 = dma.hbm_to_vmem [thread:$0]  %s4, 4096, %s59, [#allocation9], 128, 128, 8
    $region21: #{tpu_custom_call.1} parent=1 // pred_fallthru
      _
    // Predicated region
    $region22: #{tpu_custom_call.1} parent=1 // pred_check
      _
    $region23: #{tpu_custom_call.1} parent=1 // pred_check_branch
      %66 = sbr.rel (0) target = $region25
    $region24: #{tpu_custom_call.1} parent=1 // pred_region
      _
    $region25: #{tpu_custom_call.1} parent=1 // pred_fallthru
      _
    // Predicated region
    $region26: #{tpu_custom_call.1} parent=1 // pred_check
      _
    $region27: #{tpu_custom_call.1} parent=1 // pred_check_branch
      %68 = sbr.rel (0) target = $region29
    $region28: #{tpu_custom_call.1} parent=1 // pred_region
      %69 = dma.done [#allocation3], 512
    $region29: #{tpu_custom_call.1} parent=1 // pred_fallthru
      _
    // Predicated region
    $region30: #{tpu_custom_call.1} parent=1 // pred_check
      _
    $region31: #{tpu_custom_call.1} parent=1 // pred_check_branch
      %71 = sbr.rel (0) target = $region33
    $region32: #{tpu_custom_call.1} parent=1 // pred_region
      %72 = dma.done [#allocation6], 12288
    $region33: #{tpu_custom_call.1} parent=1 // pred_fallthru
      _
    // Predicated region
    $region34: #{tpu_custom_call.1} parent=1 // pred_check
      _
    $region35: #{tpu_custom_call.1} parent=1 // pred_check_branch
      %74 = sbr.rel (0) target = $region37
    $region36: #{tpu_custom_call.1} parent=1 // pred_region
      %75 = dma.done [#allocation6], 8192
    $region37: #{tpu_custom_call.1} parent=1 // pred_fallthru
      _
    // Predicated region
    $region38: #{tpu_custom_call.1} parent=1 // pred_check
      _
    $region39: #{tpu_custom_call.1} parent=1 // pred_check_branch
      %77 = sbr.rel (0) target = $region41
    $region40: #{tpu_custom_call.1} parent=1 // pred_region
      %78 = dma.done [#allocation9], 4096
    $region41: #{tpu_custom_call.1} parent=1 // pred_fallthru
      _
    %v79 = vld [vmem:[%s0] sm:$0xff]
    %v80 = vld [vmem:[%s0 + $0x8] sm:$0xff]
    %v81 = vld [vmem:[#allocation2] sm:$0xff]
    %v82 = vld [vmem:[#allocation2 + $0x8] sm:$0xff]
    %v83 = vld [vmem:[#allocation2 + $0x10] sm:$0xff]
    %v84 = vld [vmem:[#allocation2 + $0x18] sm:$0xff]
    %v85 = vld [vmem:[#allocation5] sm:$0xff]
    %v86 = vld [vmem:[#allocation5 + $0x8] sm:$0xff]
    %v87 = vld [vmem:[#allocation5 + $0x10] sm:$0xff]
    %v88 = vld [vmem:[#allocation5 + $0x18] sm:$0xff]
    %v89 = vld [vmem:[#allocation5 + $0x20] sm:$0xff]
    %v90 = vld [vmem:[#allocation5 + $0x28] sm:$0xff]
    %v91 = vld [vmem:[#allocation5 + $0x30] sm:$0xff]
    %v92 = vld [vmem:[#allocation5 + $0x38] sm:$0xff]
    %v93 = vld [vmem:[#allocation5 + $0x40] sm:$0xff]
    %v94 = vld [vmem:[#allocation5 + $0x48] sm:$0xff]
    %v95 = vld [vmem:[#allocation5 + $0x50] sm:$0xff]
    %v96 = vld [vmem:[#allocation5 + $0x58] sm:$0xff]
    %v97 = vld [vmem:[#allocation5 + $0x60] sm:$0xff]
    %v98 = vld [vmem:[#allocation5 + $0x68] sm:$0xff]
    %v99 = vld [vmem:[#allocation5 + $0x70] sm:$0xff]
    %v100 = vld [vmem:[#allocation5 + $0x78] sm:$0xff]
    %v101 = vld [vmem:[#allocation5 + $0x80] sm:$0xff]
    %v102 = vld [vmem:[#allocation5 + $0x88] sm:$0xff]
    %v103 = vld [vmem:[#allocation5 + $0x90] sm:$0xff]
    %v104 = vld [vmem:[#allocation5 + $0x98] sm:$0xff]
    %v105 = vld [vmem:[#allocation5 + $0xa0] sm:$0xff]
    %v106 = vld [vmem:[#allocation5 + $0xa8] sm:$0xff]
    %v107 = vld [vmem:[#allocation5 + $0xb0] sm:$0xff]
    %v108 = vld [vmem:[#allocation5 + $0xb8] sm:$0xff]
    %v109 = vld [vmem:[#allocation5 + $0xc0] sm:$0xff]
    %v110 = vld [vmem:[#allocation5 + $0xc8] sm:$0xff]
    %v111 = vld [vmem:[#allocation5 + $0xd0] sm:$0xff]
    %v112 = vld [vmem:[#allocation5 + $0xd8] sm:$0xff]
    %v113 = vld [vmem:[#allocation5 + $0xe0] sm:$0xff]
    %v114 = vld [vmem:[#allocation5 + $0xe8] sm:$0xff]
    %v115 = vld [vmem:[#allocation5 + $0xf0] sm:$0xff]
    %v116 = vld [vmem:[#allocation5 + $0xf8] sm:$0xff]
    %v117 = vld [vmem:[#allocation5 + $0x100] sm:$0xff]
    %v118 = vld [vmem:[#allocation5 + $0x108] sm:$0xff]
    %v119 = vld [vmem:[#allocation5 + $0x110] sm:$0xff]
    %v120 = vld [vmem:[#allocation5 + $0x118] sm:$0xff]
    %v121 = vld [vmem:[#allocation5 + $0x120] sm:$0xff]
    %v122 = vld [vmem:[#allocation5 + $0x128] sm:$0xff]
    %v123 = vld [vmem:[#allocation5 + $0x130] sm:$0xff]
    %v124 = vld [vmem:[#allocation5 + $0x138] sm:$0xff]
    %v125 = vld [vmem:[#allocation5 + $0x140] sm:$0xff]
    %v126 = vld [vmem:[#allocation5 + $0x148] sm:$0xff]
    %v127 = vld [vmem:[#allocation5 + $0x150] sm:$0xff]
    %v128 = vld [vmem:[#allocation5 + $0x158] sm:$0xff]
    %v129 = vld [vmem:[#allocation5 + $0x160] sm:$0xff]
    %v130 = vld [vmem:[#allocation5 + $0x168] sm:$0xff]
    %v131 = vld [vmem:[#allocation5 + $0x170] sm:$0xff]
    %v132 = vld [vmem:[#allocation5 + $0x178] sm:$0xff]
    %v133 = vld [vmem:[#allocation5 + $0x180] sm:$0xff]
    %v134 = vld [vmem:[#allocation5 + $0x188] sm:$0xff]
    %v135 = vld [vmem:[#allocation5 + $0x190] sm:$0xff]
    %v136 = vld [vmem:[#allocation5 + $0x198] sm:$0xff]
    %v137 = vld [vmem:[#allocation5 + $0x1a0] sm:$0xff]
    %v138 = vld [vmem:[#allocation5 + $0x1a8] sm:$0xff]
    %v139 = vld [vmem:[#allocation5 + $0x1b0] sm:$0xff]
    %v140 = vld [vmem:[#allocation5 + $0x1b8] sm:$0xff]
    %v141 = vld [vmem:[#allocation5 + $0x1c0] sm:$0xff]
    %v142 = vld [vmem:[#allocation5 + $0x1c8] sm:$0xff]
    %v143 = vld [vmem:[#allocation5 + $0x1d0] sm:$0xff]
    %v144 = vld [vmem:[#allocation5 + $0x1d8] sm:$0xff]
    %v145 = vld [vmem:[#allocation5 + $0x1e0] sm:$0xff]
    %v146 = vld [vmem:[#allocation5 + $0x1e8] sm:$0xff]
    %v147 = vld [vmem:[#allocation5 + $0x1f0] sm:$0xff]
    %v148 = vld [vmem:[#allocation5 + $0x1f8] sm:$0xff]
    %v149 = vld [vmem:[#allocation5 + $0x200] sm:$0xff]
    %v150 = vld [vmem:[#allocation5 + $0x208] sm:$0xff]
    %v151 = vld [vmem:[#allocation5 + $0x210] sm:$0xff]
    %v152 = vld [vmem:[#allocation5 + $0x218] sm:$0xff]
    %v153 = vld [vmem:[#allocation5 + $0x220] sm:$0xff]
    %v154 = vld [vmem:[#allocation5 + $0x228] sm:$0xff]
    %v155 = vld [vmem:[#allocation5 + $0x230] sm:$0xff]
    %v156 = vld [vmem:[#allocation5 + $0x238] sm:$0xff]
    %v157 = vld [vmem:[#allocation5 + $0x240] sm:$0xff]
    %v158 = vld [vmem:[#allocation5 + $0x248] sm:$0xff]
    %v159 = vld [vmem:[#allocation5 + $0x250] sm:$0xff]
    %v160 = vld [vmem:[#allocation5 + $0x258] sm:$0xff]
    %v161 = vld [vmem:[#allocation5 + $0x260] sm:$0xff]
    %v162 = vld [vmem:[#allocation5 + $0x268] sm:$0xff]
    %v163 = vld [vmem:[#allocation5 + $0x270] sm:$0xff]
    %v164 = vld [vmem:[#allocation5 + $0x278] sm:$0xff]
    %v165 = vld [vmem:[#allocation5 + $0x280] sm:$0xff]
    %v166 = vld [vmem:[#allocation5 + $0x288] sm:$0xff]
    %v167 = vld [vmem:[#allocation5 + $0x290] sm:$0xff]
    %v168 = vld [vmem:[#allocation5 + $0x298] sm:$0xff]
    %v169 = vld [vmem:[#allocation5 + $0x2a0] sm:$0xff]
    %v170 = vld [vmem:[#allocation5 + $0x2a8] sm:$0xff]
    %v171 = vld [vmem:[#allocation5 + $0x2b0] sm:$0xff]
    %v172 = vld [vmem:[#allocation5 + $0x2b8] sm:$0xff]
    %v173 = vld [vmem:[#allocation5 + $0x2c0] sm:$0xff]
    %v174 = vld [vmem:[#allocation5 + $0x2c8] sm:$0xff]
    %v175 = vld [vmem:[#allocation5 + $0x2d0] sm:$0xff]
    %v176 = vld [vmem:[#allocation5 + $0x2d8] sm:$0xff]
    %v177 = vld [vmem:[#allocation5 + $0x2e0] sm:$0xff]
    %v178 = vld [vmem:[#allocation5 + $0x2e8] sm:$0xff]
    %v179 = vld [vmem:[#allocation5 + $0x2f0] sm:$0xff]
    %v180 = vld [vmem:[#allocation5 + $0x2f8] sm:$0xff]
    %v181 = vld [vmem:[%s5] sm:$0x3f]
    %v183 = vlaneseq
    %v184 = vshrl.u32 %v183, 7
    %v185 = vsub.s32 0, %v184
    %v186 = vrot.slane %v181, %v185
    %v187 = vlaneseq
    %v188 = vshrl.u32 %v187, 7
    %v189 = vsub.s32 1, %v188
    %v190 = vrot.slane %v181, %v189
    %v191 = vlaneseq
    %v192 = vshrl.u32 %v191, 7
    %v193 = vsub.s32 2, %v192
    %v194 = vrot.slane %v181, %v193
    %v195 = vlaneseq
    %v196 = vshrl.u32 %v195, 7
    %v197 = vsub.s32 3, %v196
    %v198 = vrot.slane %v181, %v197
    %v199 = vlaneseq
    %v200 = vshrl.u32 %v199, 7
    %v201 = vsub.s32 4, %v200
    %v202 = vrot.slane %v181, %v201
    %v203 = vlaneseq
    %v204 = vshrl.u32 %v203, 7
    %v205 = vsub.s32 5, %v204
    %v206 = vrot.slane %v181, %v205
    %v215 = vunpack.c.l.b16 %v79
    %v216 = vunpack.c.h.b16 %v79
    %v217 = vunpack.c.l.b16 %v80
    %v218 = vunpack.c.h.b16 %v80
    %v219 = vpack.c.b16 %v217, %v215
    %v220 = vpack.c.b16 %v218, %v216
    %v319 = vunpack.c.l.b16 %v85
    %v320 = vunpack.c.h.b16 %v85
    %v321 = vunpack.c.l.b16 %v86
    %v322 = vunpack.c.h.b16 %v86
    %v323 = vunpack.c.l.b16 %v87
    %v324 = vunpack.c.h.b16 %v87
    %v325 = vunpack.c.l.b16 %v88
    %v326 = vunpack.c.h.b16 %v88
    %v327 = vunpack.c.l.b16 %v89
    %v328 = vunpack.c.h.b16 %v89
    %v329 = vunpack.c.l.b16 %v90
    %v330 = vunpack.c.h.b16 %v90
    %v331 = vunpack.c.l.b16 %v91
    %v332 = vunpack.c.h.b16 %v91
    %v333 = vunpack.c.l.b16 %v92
    %v334 = vunpack.c.h.b16 %v92
    %v335 = vunpack.c.l.b16 %v93
    %v336 = vunpack.c.h.b16 %v93
    %v337 = vunpack.c.l.b16 %v94
    %v338 = vunpack.c.h.b16 %v94
    %v339 = vunpack.c.l.b16 %v95
    %v340 = vunpack.c.h.b16 %v95
    %v341 = vunpack.c.l.b16 %v96
    %v342 = vunpack.c.h.b16 %v96
    %v343 = vunpack.c.l.b16 %v97
    %v344 = vunpack.c.h.b16 %v97
    %v345 = vunpack.c.l.b16 %v98
    %v346 = vunpack.c.h.b16 %v98
    %v347 = vunpack.c.l.b16 %v99
    %v348 = vunpack.c.h.b16 %v99
    %v349 = vunpack.c.l.b16 %v100
    %v350 = vunpack.c.h.b16 %v100
    %v351 = vunpack.c.l.b16 %v101
    %v352 = vunpack.c.h.b16 %v101
    %v353 = vunpack.c.l.b16 %v102
    %v354 = vunpack.c.h.b16 %v102
    %v355 = vunpack.c.l.b16 %v103
    %v356 = vunpack.c.h.b16 %v103
    %v357 = vunpack.c.l.b16 %v104
    %v358 = vunpack.c.h.b16 %v104
    %v359 = vunpack.c.l.b16 %v105
    %v360 = vunpack.c.h.b16 %v105
    %v361 = vunpack.c.l.b16 %v106
    %v362 = vunpack.c.h.b16 %v106
    %v363 = vunpack.c.l.b16 %v107
    %v364 = vunpack.c.h.b16 %v107
    %v365 = vunpack.c.l.b16 %v108
    %v366 = vunpack.c.h.b16 %v108
    %v367 = vunpack.c.l.b16 %v109
    %v368 = vunpack.c.h.b16 %v109
    %v369 = vunpack.c.l.b16 %v110
    %v370 = vunpack.c.h.b16 %v110
    %v371 = vunpack.c.l.b16 %v111
    %v372 = vunpack.c.h.b16 %v111
    %v373 = vunpack.c.l.b16 %v112
    %v374 = vunpack.c.h.b16 %v112
    %v375 = vunpack.c.l.b16 %v113
    %v376 = vunpack.c.h.b16 %v113
    %v377 = vunpack.c.l.b16 %v114
    %v378 = vunpack.c.h.b16 %v114
    %v379 = vunpack.c.l.b16 %v115
    %v380 = vunpack.c.h.b16 %v115
    %v381 = vunpack.c.l.b16 %v116
    %v382 = vunpack.c.h.b16 %v116
    %v383 = vunpack.c.l.b16 %v117
    %v384 = vunpack.c.h.b16 %v117
    %v385 = vunpack.c.l.b16 %v118
    %v386 = vunpack.c.h.b16 %v118
    %v387 = vunpack.c.l.b16 %v119
    %v388 = vunpack.c.h.b16 %v119
    %v389 = vunpack.c.l.b16 %v120
    %v390 = vunpack.c.h.b16 %v120
    %v391 = vunpack.c.l.b16 %v121
    %v392 = vunpack.c.h.b16 %v121
    %v393 = vunpack.c.l.b16 %v122
    %v394 = vunpack.c.h.b16 %v122
    %v395 = vunpack.c.l.b16 %v123
    %v396 = vunpack.c.h.b16 %v123
    %v397 = vunpack.c.l.b16 %v124
    %v398 = vunpack.c.h.b16 %v124
    %v399 = vunpack.c.l.b16 %v125
    %v400 = vunpack.c.h.b16 %v125
    %v401 = vunpack.c.l.b16 %v126
    %v402 = vunpack.c.h.b16 %v126
    %v403 = vunpack.c.l.b16 %v127
    %v404 = vunpack.c.h.b16 %v127
    %v405 = vunpack.c.l.b16 %v128
    %v406 = vunpack.c.h.b16 %v128
    %v407 = vunpack.c.l.b16 %v129
    %v408 = vunpack.c.h.b16 %v129
    %v409 = vunpack.c.l.b16 %v130
    %v410 = vunpack.c.h.b16 %v130
    %v411 = vunpack.c.l.b16 %v131
    %v412 = vunpack.c.h.b16 %v131
    %v413 = vunpack.c.l.b16 %v132
    %v414 = vunpack.c.h.b16 %v132
    %v415 = vunpack.c.l.b16 %v133
    %v416 = vunpack.c.h.b16 %v133
    %v417 = vunpack.c.l.b16 %v134
    %v418 = vunpack.c.h.b16 %v134
    %v419 = vunpack.c.l.b16 %v135
    %v420 = vunpack.c.h.b16 %v135
    %v421 = vunpack.c.l.b16 %v136
    %v422 = vunpack.c.h.b16 %v136
    %v423 = vunpack.c.l.b16 %v137
    %v424 = vunpack.c.h.b16 %v137
    %v425 = vunpack.c.l.b16 %v138
    %v426 = vunpack.c.h.b16 %v138
    %v427 = vunpack.c.l.b16 %v139
    %v428 = vunpack.c.h.b16 %v139
    %v429 = vunpack.c.l.b16 %v140
    %v430 = vunpack.c.h.b16 %v140
    %v431 = vunpack.c.l.b16 %v141
    %v432 = vunpack.c.h.b16 %v141
    %v433 = vunpack.c.l.b16 %v142
    %v434 = vunpack.c.h.b16 %v142
    %v435 = vunpack.c.l.b16 %v143
    %v436 = vunpack.c.h.b16 %v143
    %v437 = vunpack.c.l.b16 %v144
    %v438 = vunpack.c.h.b16 %v144
    %v439 = vunpack.c.l.b16 %v145
    %v440 = vunpack.c.h.b16 %v145
    %v441 = vunpack.c.l.b16 %v146
    %v442 = vunpack.c.h.b16 %v146
    %v443 = vunpack.c.l.b16 %v147
    %v444 = vunpack.c.h.b16 %v147
    %v445 = vunpack.c.l.b16 %v148
    %v446 = vunpack.c.h.b16 %v148
    %v447 = vunpack.c.l.b16 %v149
    %v448 = vunpack.c.h.b16 %v149
    %v449 = vunpack.c.l.b16 %v150
    %v450 = vunpack.c.h.b16 %v150
    %v451 = vunpack.c.l.b16 %v151
    %v452 = vunpack.c.h.b16 %v151
    %v453 = vunpack.c.l.b16 %v152
    %v454 = vunpack.c.h.b16 %v152
    %v455 = vunpack.c.l.b16 %v153
    %v456 = vunpack.c.h.b16 %v153
    %v457 = vunpack.c.l.b16 %v154
    %v458 = vunpack.c.h.b16 %v154
    %v459 = vunpack.c.l.b16 %v155
    %v460 = vunpack.c.h.b16 %v155
    %v461 = vunpack.c.l.b16 %v156
    %v462 = vunpack.c.h.b16 %v156
    %v463 = vunpack.c.l.b16 %v157
    %v464 = vunpack.c.h.b16 %v157
    %v465 = vunpack.c.l.b16 %v158
    %v466 = vunpack.c.h.b16 %v158
    %v467 = vunpack.c.l.b16 %v159
    %v468 = vunpack.c.h.b16 %v159
    %v469 = vunpack.c.l.b16 %v160
    %v470 = vunpack.c.h.b16 %v160
    %v471 = vunpack.c.l.b16 %v161
    %v472 = vunpack.c.h.b16 %v161
    %v473 = vunpack.c.l.b16 %v162
    %v474 = vunpack.c.h.b16 %v162
    %v475 = vunpack.c.l.b16 %v163
    %v476 = vunpack.c.h.b16 %v163
    %v477 = vunpack.c.l.b16 %v164
    %v478 = vunpack.c.h.b16 %v164
    %v479 = vunpack.c.l.b16 %v165
    %v480 = vunpack.c.h.b16 %v165
    %v481 = vunpack.c.l.b16 %v166
    %v482 = vunpack.c.h.b16 %v166
    %v483 = vunpack.c.l.b16 %v167
    %v484 = vunpack.c.h.b16 %v167
    %v485 = vunpack.c.l.b16 %v168
    %v486 = vunpack.c.h.b16 %v168
    %v487 = vunpack.c.l.b16 %v169
    %v488 = vunpack.c.h.b16 %v169
    %v489 = vunpack.c.l.b16 %v170
    %v490 = vunpack.c.h.b16 %v170
    %v491 = vunpack.c.l.b16 %v171
    %v492 = vunpack.c.h.b16 %v171
    %v493 = vunpack.c.l.b16 %v172
    %v494 = vunpack.c.h.b16 %v172
    %v495 = vunpack.c.l.b16 %v173
    %v496 = vunpack.c.h.b16 %v173
    %v497 = vunpack.c.l.b16 %v174
    %v498 = vunpack.c.h.b16 %v174
    %v499 = vunpack.c.l.b16 %v175
    %v500 = vunpack.c.h.b16 %v175
    %v501 = vunpack.c.l.b16 %v176
    %v502 = vunpack.c.h.b16 %v176
    %v503 = vunpack.c.l.b16 %v177
    %v504 = vunpack.c.h.b16 %v177
    %v505 = vunpack.c.l.b16 %v178
    %v506 = vunpack.c.h.b16 %v178
    %v507 = vunpack.c.l.b16 %v179
    %v508 = vunpack.c.h.b16 %v179
    %v509 = vunpack.c.l.b16 %v180
    %v510 = vunpack.c.h.b16 %v180
    %v511 = vpack.c.b16 %v325, %v319
    %v512 = vpack.c.b16 %v326, %v320
    %v513 = vpack.c.b16 %v327, %v321
    %v514 = vpack.c.b16 %v328, %v322
    %v515 = vpack.c.b16 %v329, %v323
    %v516 = vpack.c.b16 %v330, %v324
    %v517 = vpack.c.b16 %v337, %v331
    %v518 = vpack.c.b16 %v338, %v332
    %v519 = vpack.c.b16 %v339, %v333
    %v520 = vpack.c.b16 %v340, %v334
    %v521 = vpack.c.b16 %v341, %v335
    %v522 = vpack.c.b16 %v342, %v336
    %v523 = vpack.c.b16 %v349, %v343
    %v524 = vpack.c.b16 %v350, %v344
    %v525 = vpack.c.b16 %v351, %v345
    %v526 = vpack.c.b16 %v352, %v346
    %v527 = vpack.c.b16 %v353, %v347
    %v528 = vpack.c.b16 %v354, %v348
    %v529 = vpack.c.b16 %v361, %v355
    %v530 = vpack.c.b16 %v362, %v356
    %v531 = vpack.c.b16 %v363, %v357
    %v532 = vpack.c.b16 %v364, %v358
    %v533 = vpack.c.b16 %v365, %v359
    %v534 = vpack.c.b16 %v366, %v360
    %v535 = vpack.c.b16 %v373, %v367
    %v536 = vpack.c.b16 %v374, %v368
    %v537 = vpack.c.b16 %v375, %v369
    %v538 = vpack.c.b16 %v376, %v370
    %v539 = vpack.c.b16 %v377, %v371
    %v540 = vpack.c.b16 %v378, %v372
    %v541 = vpack.c.b16 %v385, %v379
    %v542 = vpack.c.b16 %v386, %v380
    %v543 = vpack.c.b16 %v387, %v381
    %v544 = vpack.c.b16 %v388, %v382
    %v545 = vpack.c.b16 %v389, %v383
    %v546 = vpack.c.b16 %v390, %v384
    %v547 = vpack.c.b16 %v397, %v391
    %v548 = vpack.c.b16 %v398, %v392
    %v549 = vpack.c.b16 %v399, %v393
    %v550 = vpack.c.b16 %v400, %v394
    %v551 = vpack.c.b16 %v401, %v395
    %v552 = vpack.c.b16 %v402, %v396
    %v553 = vpack.c.b16 %v409, %v403
    %v554 = vpack.c.b16 %v410, %v404
    %v555 = vpack.c.b16 %v411, %v405
    %v556 = vpack.c.b16 %v412, %v406
    %v557 = vpack.c.b16 %v413, %v407
    %v558 = vpack.c.b16 %v414, %v408
    %v559 = vpack.c.b16 %v421, %v415
    %v560 = vpack.c.b16 %v422, %v416
    %v561 = vpack.c.b16 %v423, %v417
    %v562 = vpack.c.b16 %v424, %v418
    %v563 = vpack.c.b16 %v425, %v419
    %v564 = vpack.c.b16 %v426, %v420
    %v565 = vpack.c.b16 %v433, %v427
    %v566 = vpack.c.b16 %v434, %v428
    %v567 = vpack.c.b16 %v435, %v429
    %v568 = vpack.c.b16 %v436, %v430
    %v569 = vpack.c.b16 %v437, %v431
    %v570 = vpack.c.b16 %v438, %v432
    %v571 = vpack.c.b16 %v445, %v439
    %v572 = vpack.c.b16 %v446, %v440
    %v573 = vpack.c.b16 %v447, %v441
    %v574 = vpack.c.b16 %v448, %v442
    %v575 = vpack.c.b16 %v449, %v443
    %v576 = vpack.c.b16 %v450, %v444
    %v577 = vpack.c.b16 %v457, %v451
    %v578 = vpack.c.b16 %v458, %v452
    %v579 = vpack.c.b16 %v459, %v453
    %v580 = vpack.c.b16 %v460, %v454
    %v581 = vpack.c.b16 %v461, %v455
    %v582 = vpack.c.b16 %v462, %v456
    %v583 = vpack.c.b16 %v469, %v463
    %v584 = vpack.c.b16 %v470, %v464
    %v585 = vpack.c.b16 %v471, %v465
    %v586 = vpack.c.b16 %v472, %v466
    %v587 = vpack.c.b16 %v473, %v467
    %v588 = vpack.c.b16 %v474, %v468
    %v589 = vpack.c.b16 %v481, %v475
    %v590 = vpack.c.b16 %v482, %v476
    %v591 = vpack.c.b16 %v483, %v477
    %v592 = vpack.c.b16 %v484, %v478
    %v593 = vpack.c.b16 %v485, %v479
    %v594 = vpack.c.b16 %v486, %v480
    %v595 = vpack.c.b16 %v493, %v487
    %v596 = vpack.c.b16 %v494, %v488
    %v597 = vpack.c.b16 %v495, %v489
    %v598 = vpack.c.b16 %v496, %v490
    %v599 = vpack.c.b16 %v497, %v491
    %v600 = vpack.c.b16 %v498, %v492
    %v601 = vpack.c.b16 %v505, %v499
    %v602 = vpack.c.b16 %v506, %v500
    %v603 = vpack.c.b16 %v507, %v501
    %v604 = vpack.c.b16 %v508, %v502
    %v605 = vpack.c.b16 %v509, %v503
    %v606 = vpack.c.b16 %v510, %v504
    %703 = vmatprep.subr.bf16.mxu0 %v554
    %704 = vmatpush1.bf16.msra.mxu0 %v553
    %705 = vmatprep.subr.bf16.mxu0 %v548
    %706 = vmatpush1.bf16.msra.mxu0 %v547
    %707 = vmatprep.subr.bf16.mxu0 %v542
    %708 = vmatpush1.bf16.msra.mxu0 %v541
    %709 = vmatprep.subr.bf16.mxu0 %v536
    %710 = vmatpush1.bf16.msra.mxu0 %v535
    %711 = vmatprep.subr.bf16.mxu0 %v530
    %712 = vmatpush1.bf16.msra.mxu0 %v529
    %713 = vmatprep.subr.bf16.mxu0 %v524
    %714 = vmatpush1.bf16.msra.mxu0 %v523
    %715 = vmatprep.subr.bf16.mxu0 %v518
    %716 = vmatpush1.bf16.msra.mxu0 %v517
    %717 = vmatprep.subr.bf16.mxu0 %v512
    %718 = vmatpush1.bf16.msra.mxu0 %v511
    %719 = vmatprep.subr.bf16.mxu0 %v602
    %720 = vmatpush2.bf16.msra.mxu0 %v601
    %721 = vmatprep.subr.bf16.mxu0 %v596
    %722 = vmatpush2.bf16.msra.mxu0 %v595
    %723 = vmatprep.subr.bf16.mxu0 %v590
    %724 = vmatpush2.bf16.msra.mxu0 %v589
    %725 = vmatprep.subr.bf16.mxu0 %v584
    %726 = vmatpush2.bf16.msra.mxu0 %v583
    %727 = vmatprep.subr.bf16.mxu0 %v578
    %728 = vmatpush2.bf16.msra.mxu0 %v577
    %729 = vmatprep.subr.bf16.mxu0 %v572
    %730 = vmatpush2.bf16.msra.mxu0 %v571
    %731 = vmatprep.subr.bf16.mxu0 %v566
    %732 = vmatpush2.bf16.msra.mxu0 %v565
    %733 = vmatprep.subr.bf16.mxu0 %v560
    %734 = vmatpush2.bf16.msra.mxu0 %v559
    %735 = vmatprep.mubr.bf16.mxu0 %v220
    %736 = vmatmul.mubr.bf16.gmra.mxu0 %v219
    %v737 = vpop.f32.mrf.mxu0
    %v738 = vadd.f32 %v186, %v737
    %v739 = vpop.f32.mrf.mxu0
    %v740 = vadd.f32 %v190, %v739
    %v741 = vpop.f32.mrf.mxu0
    %v742 = vadd.f32 %v186, %v741
    %v743 = vpop.f32.mrf.mxu0
    %v744 = vadd.f32 %v190, %v743
    %745 = vdwg.mxu0
    %746 = vmatprep.subr.bf16.mxu0 %v556
    %747 = vmatpush1.bf16.msra.mxu0 %v555
    %748 = vmatprep.subr.bf16.mxu0 %v550
    %749 = vmatpush1.bf16.msra.mxu0 %v549
    %750 = vmatprep.subr.bf16.mxu0 %v544
    %751 = vmatpush1.bf16.msra.mxu0 %v543
    %752 = vmatprep.subr.bf16.mxu0 %v538
    %753 = vmatpush1.bf16.msra.mxu0 %v537
    %754 = vmatprep.subr.bf16.mxu0 %v532
    %755 = vmatpush1.bf16.msra.mxu0 %v531
    %756 = vmatprep.subr.bf16.mxu0 %v526
    %757 = vmatpush1.bf16.msra.mxu0 %v525
    %758 = vmatprep.subr.bf16.mxu0 %v520
    %759 = vmatpush1.bf16.msra.mxu0 %v519
    %760 = vmatprep.subr.bf16.mxu0 %v514
    %761 = vmatpush1.bf16.msra.mxu0 %v513
    %762 = vmatprep.subr.bf16.mxu0 %v604
    %763 = vmatpush2.bf16.msra.mxu0 %v603
    %764 = vmatprep.subr.bf16.mxu0 %v598
    %765 = vmatpush2.bf16.msra.mxu0 %v597
    %766 = vmatprep.subr.bf16.mxu0 %v592
    %767 = vmatpush2.bf16.msra.mxu0 %v591
    %768 = vmatprep.subr.bf16.mxu0 %v586
    %769 = vmatpush2.bf16.msra.mxu0 %v585
    %770 = vmatprep.subr.bf16.mxu0 %v580
    %771 = vmatpush2.bf16.msra.mxu0 %v579
    %772 = vmatprep.subr.bf16.mxu0 %v574
    %773 = vmatpush2.bf16.msra.mxu0 %v573
    %774 = vmatprep.subr.bf16.mxu0 %v568
    %775 = vmatpush2.bf16.msra.mxu0 %v567
    %776 = vmatprep.subr.bf16.mxu0 %v562
    %777 = vmatpush2.bf16.msra.mxu0 %v561
    %778 = vmatprep.mubr.bf16.mxu0 %v220
    %779 = vmatmul.mubr.bf16.gmra.mxu0 %v219
    %v780 = vpop.f32.mrf.mxu0
    %v781 = vadd.f32 %v194, %v780
    %v782 = vpop.f32.mrf.mxu0
    %v783 = vadd.f32 %v198, %v782
    %v784 = vpop.f32.mrf.mxu0
    %v785 = vadd.f32 %v194, %v784
    %v786 = vpop.f32.mrf.mxu0
    %v787 = vadd.f32 %v198, %v786
    %788 = vdwg.mxu0
    %789 = vmatprep.subr.bf16.mxu0 %v558
    %790 = vmatpush1.bf16.msra.mxu0 %v557
    %791 = vmatprep.subr.bf16.mxu0 %v552
    %792 = vmatpush1.bf16.msra.mxu0 %v551
    %793 = vmatprep.subr.bf16.mxu0 %v546
    %794 = vmatpush1.bf16.msra.mxu0 %v545
    %795 = vmatprep.subr.bf16.mxu0 %v540
    %796 = vmatpush1.bf16.msra.mxu0 %v539
    %797 = vmatprep.subr.bf16.mxu0 %v534
    %798 = vmatpush1.bf16.msra.mxu0 %v533
    %799 = vmatprep.subr.bf16.mxu0 %v528
    %800 = vmatpush1.bf16.msra.mxu0 %v527
    %801 = vmatprep.subr.bf16.mxu0 %v522
    %802 = vmatpush1.bf16.msra.mxu0 %v521
    %803 = vmatprep.subr.bf16.mxu0 %v516
    %804 = vmatpush1.bf16.msra.mxu0 %v515
    %805 = vmatprep.subr.bf16.mxu0 %v606
    %806 = vmatpush2.bf16.msra.mxu0 %v605
    %807 = vmatprep.subr.bf16.mxu0 %v600
    %808 = vmatpush2.bf16.msra.mxu0 %v599
    %809 = vmatprep.subr.bf16.mxu0 %v594
    %810 = vmatpush2.bf16.msra.mxu0 %v593
    %811 = vmatprep.subr.bf16.mxu0 %v588
    %812 = vmatpush2.bf16.msra.mxu0 %v587
    %813 = vmatprep.subr.bf16.mxu0 %v582
    %814 = vmatpush2.bf16.msra.mxu0 %v581
    %815 = vmatprep.subr.bf16.mxu0 %v576
    %816 = vmatpush2.bf16.msra.mxu0 %v575
    %817 = vmatprep.subr.bf16.mxu0 %v570
    %818 = vmatpush2.bf16.msra.mxu0 %v569
    %819 = vmatprep.subr.bf16.mxu0 %v564
    %820 = vmatpush2.bf16.msra.mxu0 %v563
    %821 = vmatprep.mubr.bf16.mxu0 %v220
    %822 = vmatmul.mubr.bf16.gmra.mxu0 %v219
    %v823 = vpop.f32.mrf.mxu0
    %v824 = vadd.f32 %v202, %v823
    %v825 = vpop.f32.mrf.mxu0
    %v826 = vadd.f32 %v206, %v825
    %v827 = vpop.f32.mrf.mxu0
    %v828 = vadd.f32 %v202, %v827
    %v829 = vpop.f32.mrf.mxu0
    %v830 = vadd.f32 %v206, %v829
    %831 = vdwg.mxu0
    %v832 = vpack.c.bf16 %v83, %v81
    %v833 = vpack.c.bf16 %v84, %v82
    %v834 = vld [vmem:[#allocation7] sm:$0xff]
    %v835 = vld [vmem:[#allocation7 + $0x8] sm:$0xff]
    %v836 = vld [vmem:[#allocation7 + $0x10] sm:$0xff]
    %v837 = vld [vmem:[#allocation7 + $0x18] sm:$0xff]
    %v838 = vld [vmem:[#allocation7 + $0x20] sm:$0xff]
    %v839 = vld [vmem:[#allocation7 + $0x28] sm:$0xff]
    %v840 = vld [vmem:[#allocation7 + $0x30] sm:$0xff]
    %v841 = vld [vmem:[#allocation7 + $0x38] sm:$0xff]
    %v842 = vld [vmem:[#allocation7 + $0x40] sm:$0xff]
    %v843 = vld [vmem:[#allocation7 + $0x48] sm:$0xff]
    %v844 = vld [vmem:[#allocation7 + $0x50] sm:$0xff]
    %v845 = vld [vmem:[#allocation7 + $0x58] sm:$0xff]
    %v846 = vld [vmem:[#allocation7 + $0x60] sm:$0xff]
    %v847 = vld [vmem:[#allocation7 + $0x68] sm:$0xff]
    %v848 = vld [vmem:[#allocation7 + $0x70] sm:$0xff]
    %v849 = vld [vmem:[#allocation7 + $0x78] sm:$0xff]
    %v850 = vld [vmem:[#allocation7 + $0x80] sm:$0xff]
    %v851 = vld [vmem:[#allocation7 + $0x88] sm:$0xff]
    %v852 = vld [vmem:[#allocation7 + $0x90] sm:$0xff]
    %v853 = vld [vmem:[#allocation7 + $0x98] sm:$0xff]
    %v854 = vld [vmem:[#allocation7 + $0xa0] sm:$0xff]
    %v855 = vld [vmem:[#allocation7 + $0xa8] sm:$0xff]
    %v856 = vld [vmem:[#allocation7 + $0xb0] sm:$0xff]
    %v857 = vld [vmem:[#allocation7 + $0xb8] sm:$0xff]
    %v858 = vld [vmem:[#allocation7 + $0xc0] sm:$0xff]
    %v859 = vld [vmem:[#allocation7 + $0xc8] sm:$0xff]
    %v860 = vld [vmem:[#allocation7 + $0xd0] sm:$0xff]
    %v861 = vld [vmem:[#allocation7 + $0xd8] sm:$0xff]
    %v862 = vld [vmem:[#allocation7 + $0xe0] sm:$0xff]
    %v863 = vld [vmem:[#allocation7 + $0xe8] sm:$0xff]
    %v864 = vld [vmem:[#allocation7 + $0xf0] sm:$0xff]
    %v865 = vld [vmem:[#allocation7 + $0xf8] sm:$0xff]
    %v866 = vld [vmem:[#allocation7 + $0x100] sm:$0xff]
    %v867 = vld [vmem:[#allocation7 + $0x108] sm:$0xff]
    %v868 = vld [vmem:[#allocation7 + $0x110] sm:$0xff]
    %v869 = vld [vmem:[#allocation7 + $0x118] sm:$0xff]
    %v870 = vld [vmem:[#allocation7 + $0x120] sm:$0xff]
    %v871 = vld [vmem:[#allocation7 + $0x128] sm:$0xff]
    %v872 = vld [vmem:[#allocation7 + $0x130] sm:$0xff]
    %v873 = vld [vmem:[#allocation7 + $0x138] sm:$0xff]
    %v874 = vld [vmem:[#allocation7 + $0x140] sm:$0xff]
    %v875 = vld [vmem:[#allocation7 + $0x148] sm:$0xff]
    %v876 = vld [vmem:[#allocation7 + $0x150] sm:$0xff]
    %v877 = vld [vmem:[#allocation7 + $0x158] sm:$0xff]
    %v878 = vld [vmem:[#allocation7 + $0x160] sm:$0xff]
    %v879 = vld [vmem:[#allocation7 + $0x168] sm:$0xff]
    %v880 = vld [vmem:[#allocation7 + $0x170] sm:$0xff]
    %v881 = vld [vmem:[#allocation7 + $0x178] sm:$0xff]
    %v882 = vld [vmem:[#allocation7 + $0x180] sm:$0xff]
    %v883 = vld [vmem:[#allocation7 + $0x188] sm:$0xff]
    %v884 = vld [vmem:[#allocation7 + $0x190] sm:$0xff]
    %v885 = vld [vmem:[#allocation7 + $0x198] sm:$0xff]
    %v886 = vld [vmem:[#allocation7 + $0x1a0] sm:$0xff]
    %v887 = vld [vmem:[#allocation7 + $0x1a8] sm:$0xff]
    %v888 = vld [vmem:[#allocation7 + $0x1b0] sm:$0xff]
    %v889 = vld [vmem:[#allocation7 + $0x1b8] sm:$0xff]
    %v890 = vld [vmem:[#allocation7 + $0x1c0] sm:$0xff]
    %v891 = vld [vmem:[#allocation7 + $0x1c8] sm:$0xff]
    %v892 = vld [vmem:[#allocation7 + $0x1d0] sm:$0xff]
    %v893 = vld [vmem:[#allocation7 + $0x1d8] sm:$0xff]
    %v894 = vld [vmem:[#allocation7 + $0x1e0] sm:$0xff]
    %v895 = vld [vmem:[#allocation7 + $0x1e8] sm:$0xff]
    %v896 = vld [vmem:[#allocation7 + $0x1f0] sm:$0xff]
    %v897 = vld [vmem:[#allocation7 + $0x1f8] sm:$0xff]
    %v962 = vunpack.c.l.b16 %v834
    %v963 = vunpack.c.h.b16 %v834
    %v964 = vunpack.c.l.b16 %v835
    %v965 = vunpack.c.h.b16 %v835
    %v966 = vunpack.c.l.b16 %v836
    %v967 = vunpack.c.h.b16 %v836
    %v968 = vunpack.c.l.b16 %v837
    %v969 = vunpack.c.h.b16 %v837
    %v970 = vunpack.c.l.b16 %v838
    %v971 = vunpack.c.h.b16 %v838
    %v972 = vunpack.c.l.b16 %v839
    %v973 = vunpack.c.h.b16 %v839
    %v974 = vunpack.c.l.b16 %v840
    %v975 = vunpack.c.h.b16 %v840
    %v976 = vunpack.c.l.b16 %v841
    %v977 = vunpack.c.h.b16 %v841
    %v978 = vunpack.c.l.b16 %v842
    %v979 = vunpack.c.h.b16 %v842
    %v980 = vunpack.c.l.b16 %v843
    %v981 = vunpack.c.h.b16 %v843
    %v982 = vunpack.c.l.b16 %v844
    %v983 = vunpack.c.h.b16 %v844
    %v984 = vunpack.c.l.b16 %v845
    %v985 = vunpack.c.h.b16 %v845
    %v986 = vunpack.c.l.b16 %v846
    %v987 = vunpack.c.h.b16 %v846
    %v988 = vunpack.c.l.b16 %v847
    %v989 = vunpack.c.h.b16 %v847
    %v990 = vunpack.c.l.b16 %v848
    %v991 = vunpack.c.h.b16 %v848
    %v992 = vunpack.c.l.b16 %v849
    %v993 = vunpack.c.h.b16 %v849
    %v994 = vunpack.c.l.b16 %v850
    %v995 = vunpack.c.h.b16 %v850
    %v996 = vunpack.c.l.b16 %v851
    %v997 = vunpack.c.h.b16 %v851
    %v998 = vunpack.c.l.b16 %v852
    %v999 = vunpack.c.h.b16 %v852
    %v1000 = vunpack.c.l.b16 %v853
    %v1001 = vunpack.c.h.b16 %v853
    %v1002 = vunpack.c.l.b16 %v854
    %v1003 = vunpack.c.h.b16 %v854
    %v1004 = vunpack.c.l.b16 %v855
    %v1005 = vunpack.c.h.b16 %v855
    %v1006 = vunpack.c.l.b16 %v856
    %v1007 = vunpack.c.h.b16 %v856
    %v1008 = vunpack.c.l.b16 %v857
    %v1009 = vunpack.c.h.b16 %v857
    %v1010 = vunpack.c.l.b16 %v858
    %v1011 = vunpack.c.h.b16 %v858
    %v1012 = vunpack.c.l.b16 %v859
    %v1013 = vunpack.c.h.b16 %v859
    %v1014 = vunpack.c.l.b16 %v860
    %v1015 = vunpack.c.h.b16 %v860
    %v1016 = vunpack.c.l.b16 %v861
    %v1017 = vunpack.c.h.b16 %v861
    %v1018 = vunpack.c.l.b16 %v862
    %v1019 = vunpack.c.h.b16 %v862
    %v1020 = vunpack.c.l.b16 %v863
    %v1021 = vunpack.c.h.b16 %v863
    %v1022 = vunpack.c.l.b16 %v864
    %v1023 = vunpack.c.h.b16 %v864
    %v1024 = vunpack.c.l.b16 %v865
    %v1025 = vunpack.c.h.b16 %v865
    %v1026 = vunpack.c.l.b16 %v866
    %v1027 = vunpack.c.h.b16 %v866
    %v1028 = vunpack.c.l.b16 %v867
    %v1029 = vunpack.c.h.b16 %v867
    %v1030 = vunpack.c.l.b16 %v868
    %v1031 = vunpack.c.h.b16 %v868
    %v1032 = vunpack.c.l.b16 %v869
    %v1033 = vunpack.c.h.b16 %v869
    %v1034 = vunpack.c.l.b16 %v870
    %v1035 = vunpack.c.h.b16 %v870
    %v1036 = vunpack.c.l.b16 %v871
    %v1037 = vunpack.c.h.b16 %v871
    %v1038 = vunpack.c.l.b16 %v872
    %v1039 = vunpack.c.h.b16 %v872
    %v1040 = vunpack.c.l.b16 %v873
    %v1041 = vunpack.c.h.b16 %v873
    %v1042 = vunpack.c.l.b16 %v874
    %v1043 = vunpack.c.h.b16 %v874
    %v1044 = vunpack.c.l.b16 %v875
    %v1045 = vunpack.c.h.b16 %v875
    %v1046 = vunpack.c.l.b16 %v876
    %v1047 = vunpack.c.h.b16 %v876
    %v1048 = vunpack.c.l.b16 %v877
    %v1049 = vunpack.c.h.b16 %v877
    %v1050 = vunpack.c.l.b16 %v878
    %v1051 = vunpack.c.h.b16 %v878
    %v1052 = vunpack.c.l.b16 %v879
    %v1053 = vunpack.c.h.b16 %v879
    %v1054 = vunpack.c.l.b16 %v880
    %v1055 = vunpack.c.h.b16 %v880
    %v1056 = vunpack.c.l.b16 %v881
    %v1057 = vunpack.c.h.b16 %v881
    %v1058 = vunpack.c.l.b16 %v882
    %v1059 = vunpack.c.h.b16 %v882
    %v1060 = vunpack.c.l.b16 %v883
    %v1061 = vunpack.c.h.b16 %v883
    %v1062 = vunpack.c.l.b16 %v884
    %v1063 = vunpack.c.h.b16 %v884
    %v1064 = vunpack.c.l.b16 %v885
    %v1065 = vunpack.c.h.b16 %v885
    %v1066 = vunpack.c.l.b16 %v886
    %v1067 = vunpack.c.h.b16 %v886
    %v1068 = vunpack.c.l.b16 %v887
    %v1069 = vunpack.c.h.b16 %v887
    %v1070 = vunpack.c.l.b16 %v888
    %v1071 = vunpack.c.h.b16 %v888
    %v1072 = vunpack.c.l.b16 %v889
    %v1073 = vunpack.c.h.b16 %v889
    %v1074 = vunpack.c.l.b16 %v890
    %v1075 = vunpack.c.h.b16 %v890
    %v1076 = vunpack.c.l.b16 %v891
    %v1077 = vunpack.c.h.b16 %v891
    %v1078 = vunpack.c.l.b16 %v892
    %v1079 = vunpack.c.h.b16 %v892
    %v1080 = vunpack.c.l.b16 %v893
    %v1081 = vunpack.c.h.b16 %v893
    %v1082 = vunpack.c.l.b16 %v894
    %v1083 = vunpack.c.h.b16 %v894
    %v1084 = vunpack.c.l.b16 %v895
    %v1085 = vunpack.c.h.b16 %v895
    %v1086 = vunpack.c.l.b16 %v896
    %v1087 = vunpack.c.h.b16 %v896
    %v1088 = vunpack.c.l.b16 %v897
    %v1089 = vunpack.c.h.b16 %v897
    %v1090 = vpack.c.b16 %v966, %v962
    %v1091 = vpack.c.b16 %v967, %v963
    %v1092 = vpack.c.b16 %v968, %v964
    %v1093 = vpack.c.b16 %v969, %v965
    %v1094 = vpack.c.b16 %v974, %v970
    %v1095 = vpack.c.b16 %v975, %v971
    %v1096 = vpack.c.b16 %v976, %v972
    %v1097 = vpack.c.b16 %v977, %v973
    %v1098 = vpack.c.b16 %v982, %v978
    %v1099 = vpack.c.b16 %v983, %v979
    %v1100 = vpack.c.b16 %v984, %v980
    %v1101 = vpack.c.b16 %v985, %v981
    %v1102 = vpack.c.b16 %v990, %v986
    %v1103 = vpack.c.b16 %v991, %v987
    %v1104 = vpack.c.b16 %v992, %v988
    %v1105 = vpack.c.b16 %v993, %v989
    %v1106 = vpack.c.b16 %v998, %v994
    %v1107 = vpack.c.b16 %v999, %v995
    %v1108 = vpack.c.b16 %v1000, %v996
    %v1109 = vpack.c.b16 %v1001, %v997
    %v1110 = vpack.c.b16 %v1006, %v1002
    %v1111 = vpack.c.b16 %v1007, %v1003
    %v1112 = vpack.c.b16 %v1008, %v1004
    %v1113 = vpack.c.b16 %v1009, %v1005
    %v1114 = vpack.c.b16 %v1014, %v1010
    %v1115 = vpack.c.b16 %v1015, %v1011
    %v1116 = vpack.c.b16 %v1016, %v1012
    %v1117 = vpack.c.b16 %v1017, %v1013
    %v1118 = vpack.c.b16 %v1022, %v1018
    %v1119 = vpack.c.b16 %v1023, %v1019
    %v1120 = vpack.c.b16 %v1024, %v1020
    %v1121 = vpack.c.b16 %v1025, %v1021
    %v1122 = vpack.c.b16 %v1030, %v1026
    %v1123 = vpack.c.b16 %v1031, %v1027
    %v1124 = vpack.c.b16 %v1032, %v1028
    %v1125 = vpack.c.b16 %v1033, %v1029
    %v1126 = vpack.c.b16 %v1038, %v1034
    %v1127 = vpack.c.b16 %v1039, %v1035
    %v1128 = vpack.c.b16 %v1040, %v1036
    %v1129 = vpack.c.b16 %v1041, %v1037
    %v1130 = vpack.c.b16 %v1046, %v1042
    %v1131 = vpack.c.b16 %v1047, %v1043
    %v1132 = vpack.c.b16 %v1048, %v1044
    %v1133 = vpack.c.b16 %v1049, %v1045
    %v1134 = vpack.c.b16 %v1054, %v1050
    %v1135 = vpack.c.b16 %v1055, %v1051
    %v1136 = vpack.c.b16 %v1056, %v1052
    %v1137 = vpack.c.b16 %v1057, %v1053
    %v1138 = vpack.c.b16 %v1062, %v1058
    %v1139 = vpack.c.b16 %v1063, %v1059
    %v1140 = vpack.c.b16 %v1064, %v1060
    %v1141 = vpack.c.b16 %v1065, %v1061
    %v1142 = vpack.c.b16 %v1070, %v1066
    %v1143 = vpack.c.b16 %v1071, %v1067
    %v1144 = vpack.c.b16 %v1072, %v1068
    %v1145 = vpack.c.b16 %v1073, %v1069
    %v1146 = vpack.c.b16 %v1078, %v1074
    %v1147 = vpack.c.b16 %v1079, %v1075
    %v1148 = vpack.c.b16 %v1080, %v1076
    %v1149 = vpack.c.b16 %v1081, %v1077
    %v1150 = vpack.c.b16 %v1086, %v1082
    %v1151 = vpack.c.b16 %v1087, %v1083
    %v1152 = vpack.c.b16 %v1088, %v1084
    %v1153 = vpack.c.b16 %v1089, %v1085
    %1218 = vmatprep.subr.bf16.mxu0 %v1119
    %1219 = vmatpush1.bf16.msra.mxu0 %v1118
    %1220 = vmatprep.subr.bf16.mxu0 %v1115
    %1221 = vmatpush1.bf16.msra.mxu0 %v1114
    %1222 = vmatprep.subr.bf16.mxu0 %v1111
    %1223 = vmatpush1.bf16.msra.mxu0 %v1110
    %1224 = vmatprep.subr.bf16.mxu0 %v1107
    %1225 = vmatpush1.bf16.msra.mxu0 %v1106
    %1226 = vmatprep.subr.bf16.mxu0 %v1103
    %1227 = vmatpush1.bf16.msra.mxu0 %v1102
    %1228 = vmatprep.subr.bf16.mxu0 %v1099
    %1229 = vmatpush1.bf16.msra.mxu0 %v1098
    %1230 = vmatprep.subr.bf16.mxu0 %v1095
    %1231 = vmatpush1.bf16.msra.mxu0 %v1094
    %1232 = vmatprep.subr.bf16.mxu0 %v1091
    %1233 = vmatpush1.bf16.msra.mxu0 %v1090
    %1234 = vmatprep.subr.bf16.mxu0 %v1151
    %1235 = vmatpush2.bf16.msra.mxu0 %v1150
    %1236 = vmatprep.subr.bf16.mxu0 %v1147
    %1237 = vmatpush2.bf16.msra.mxu0 %v1146
    %1238 = vmatprep.subr.bf16.mxu0 %v1143
    %1239 = vmatpush2.bf16.msra.mxu0 %v1142
    %1240 = vmatprep.subr.bf16.mxu0 %v1139
    %1241 = vmatpush2.bf16.msra.mxu0 %v1138
    %1242 = vmatprep.subr.bf16.mxu0 %v1135
    %1243 = vmatpush2.bf16.msra.mxu0 %v1134
    %1244 = vmatprep.subr.bf16.mxu0 %v1131
    %1245 = vmatpush2.bf16.msra.mxu0 %v1130
    %1246 = vmatprep.subr.bf16.mxu0 %v1127
    %1247 = vmatpush2.bf16.msra.mxu0 %v1126
    %1248 = vmatprep.subr.bf16.mxu0 %v1123
    %1249 = vmatpush2.bf16.msra.mxu0 %v1122
    %1250 = vmatprep.mubr.bf16.mxu0 %v833
    %1251 = vmatmul.mubr.bf16.gmra.mxu0 %v832
    %v1252 = vpop.f32.mrf.mxu0
    %v1253 = vadd.f32 0.0, %v1252
    %v1254 = vpop.f32.mrf.mxu0
    %v1255 = vadd.f32 0.0, %v1254
    %v1256 = vpop.f32.mrf.mxu0
    %v1257 = vadd.f32 0.0, %v1256
    %v1258 = vpop.f32.mrf.mxu0
    %v1259 = vadd.f32 0.0, %v1258
    %1260 = vdwg.mxu0
    %1261 = vmatprep.subr.bf16.mxu0 %v1121
    %1262 = vmatpush1.bf16.msra.mxu0 %v1120
    %1263 = vmatprep.subr.bf16.mxu0 %v1117
    %1264 = vmatpush1.bf16.msra.mxu0 %v1116
    %1265 = vmatprep.subr.bf16.mxu0 %v1113
    %1266 = vmatpush1.bf16.msra.mxu0 %v1112
    %1267 = vmatprep.subr.bf16.mxu0 %v1109
    %1268 = vmatpush1.bf16.msra.mxu0 %v1108
    %1269 = vmatprep.subr.bf16.mxu0 %v1105
    %1270 = vmatpush1.bf16.msra.mxu0 %v1104
    %1271 = vmatprep.subr.bf16.mxu0 %v1101
    %1272 = vmatpush1.bf16.msra.mxu0 %v1100
    %1273 = vmatprep.subr.bf16.mxu0 %v1097
    %1274 = vmatpush1.bf16.msra.mxu0 %v1096
    %1275 = vmatprep.subr.bf16.mxu0 %v1093
    %1276 = vmatpush1.bf16.msra.mxu0 %v1092
    %1277 = vmatprep.subr.bf16.mxu0 %v1153
    %1278 = vmatpush2.bf16.msra.mxu0 %v1152
    %1279 = vmatprep.subr.bf16.mxu0 %v1149
    %1280 = vmatpush2.bf16.msra.mxu0 %v1148
    %1281 = vmatprep.subr.bf16.mxu0 %v1145
    %1282 = vmatpush2.bf16.msra.mxu0 %v1144
    %1283 = vmatprep.subr.bf16.mxu0 %v1141
    %1284 = vmatpush2.bf16.msra.mxu0 %v1140
    %1285 = vmatprep.subr.bf16.mxu0 %v1137
    %1286 = vmatpush2.bf16.msra.mxu0 %v1136
    %1287 = vmatprep.subr.bf16.mxu0 %v1133
    %1288 = vmatpush2.bf16.msra.mxu0 %v1132
    %1289 = vmatprep.subr.bf16.mxu0 %v1129
    %1290 = vmatpush2.bf16.msra.mxu0 %v1128
    %1291 = vmatprep.subr.bf16.mxu0 %v1125
    %1292 = vmatpush2.bf16.msra.mxu0 %v1124
    %1293 = vmatprep.mubr.bf16.mxu0 %v833
    %1294 = vmatmul.mubr.bf16.gmra.mxu0 %v832
    %v1295 = vpop.f32.mrf.mxu0
    %v1296 = vadd.f32 0.0, %v1295
    %v1297 = vpop.f32.mrf.mxu0
    %v1298 = vadd.f32 0.0, %v1297
    %v1299 = vpop.f32.mrf.mxu0
    %v1300 = vadd.f32 0.0, %v1299
    %v1301 = vpop.f32.mrf.mxu0
    %v1302 = vadd.f32 0.0, %v1301
    %1303 = vdwg.mxu0
    %v1304 = vadd.f32 %v738, %v1253
    %v1305 = vadd.f32 %v740, %v1255
    %v1306 = vadd.f32 %v742, %v1257
    %v1307 = vadd.f32 %v744, %v1259
    %v1308 = vxor.u32 %v1304, 2147483648
    %v1309 = vxor.u32 %v1305, 2147483648
    %v1310 = vxor.u32 %v1306, 2147483648
    %v1311 = vxor.u32 %v1307, 2147483648
    %v1312 = vmul.f32 %v1308, 1.442695
    %v1313 = vpow.pop %v1312
    %v1314 = vmul.f32 %v1309, 1.442695
    %v1315 = vpow.pop %v1314
    %v1316 = vmul.f32 %v1310, 1.442695
    %v1317 = vpow.pop %v1316
    %v1318 = vmul.f32 %v1311, 1.442695
    %v1319 = vpow.pop %v1318
    %v1320 = vadd.f32 %v1313, 1.0
    %v1321 = vadd.f32 %v1315, 1.0
    %v1322 = vadd.f32 %v1317, 1.0
    %v1323 = vadd.f32 %v1319, 1.0
    %v1324 = vrcp.pop %v1320
    %v1325 = vmul.f32 1.0, %v1324
    %v1326 = vrcp.pop %v1321
    %v1327 = vmul.f32 1.0, %v1326
    %v1328 = vrcp.pop %v1322
    %v1329 = vmul.f32 1.0, %v1328
    %v1330 = vrcp.pop %v1323
    %v1331 = vmul.f32 1.0, %v1330
    %v1332 = vadd.f32 %v781, %v1296
    %v1333 = vadd.f32 %v783, %v1298
    %v1334 = vadd.f32 %v785, %v1300
    %v1335 = vadd.f32 %v787, %v1302
    %v1336 = vxor.u32 %v1332, 2147483648
    %v1337 = vxor.u32 %v1333, 2147483648
    %v1338 = vxor.u32 %v1334, 2147483648
    %v1339 = vxor.u32 %v1335, 2147483648
    %v1340 = vmul.f32 %v1336, 1.442695
    %v1341 = vpow.pop %v1340
    %v1342 = vmul.f32 %v1337, 1.442695
    %v1343 = vpow.pop %v1342
    %v1344 = vmul.f32 %v1338, 1.442695
    %v1345 = vpow.pop %v1344
    %v1346 = vmul.f32 %v1339, 1.442695
    %v1347 = vpow.pop %v1346
    %v1348 = vadd.f32 %v1341, 1.0
    %v1349 = vadd.f32 %v1343, 1.0
    %v1350 = vadd.f32 %v1345, 1.0
    %v1351 = vadd.f32 %v1347, 1.0
    %v1352 = vrcp.pop %v1348
    %v1353 = vmul.f32 1.0, %v1352
    %v1354 = vrcp.pop %v1349
    %v1355 = vmul.f32 1.0, %v1354
    %v1356 = vrcp.pop %v1350
    %v1357 = vmul.f32 1.0, %v1356
    %v1358 = vrcp.pop %v1351
    %v1359 = vmul.f32 1.0, %v1358
    %v1360 = vmul.f32 %v1353, %v81
    %v1361 = vmul.f32 %v1355, %v82
    %v1362 = vmul.f32 %v1357, %v83
    %v1363 = vmul.f32 %v1359, %v84
    %v1364 = vpack.c.bf16 %v1362, %v1360
    %v1365 = vpack.c.bf16 %v1363, %v1361
    %v1366 = vld [vmem:[#allocation8] sm:$0xff]
    %v1367 = vld [vmem:[#allocation8 + $0x8] sm:$0xff]
    %v1368 = vld [vmem:[#allocation8 + $0x10] sm:$0xff]
    %v1369 = vld [vmem:[#allocation8 + $0x18] sm:$0xff]
    %v1370 = vld [vmem:[#allocation8 + $0x20] sm:$0xff]
    %v1371 = vld [vmem:[#allocation8 + $0x28] sm:$0xff]
    %v1372 = vld [vmem:[#allocation8 + $0x30] sm:$0xff]
    %v1373 = vld [vmem:[#allocation8 + $0x38] sm:$0xff]
    %v1374 = vld [vmem:[#allocation8 + $0x40] sm:$0xff]
    %v1375 = vld [vmem:[#allocation8 + $0x48] sm:$0xff]
    %v1376 = vld [vmem:[#allocation8 + $0x50] sm:$0xff]
    %v1377 = vld [vmem:[#allocation8 + $0x58] sm:$0xff]
    %v1378 = vld [vmem:[#allocation8 + $0x60] sm:$0xff]
    %v1379 = vld [vmem:[#allocation8 + $0x68] sm:$0xff]
    %v1380 = vld [vmem:[#allocation8 + $0x70] sm:$0xff]
    %v1381 = vld [vmem:[#allocation8 + $0x78] sm:$0xff]
    %v1382 = vld [vmem:[#allocation8 + $0x80] sm:$0xff]
    %v1383 = vld [vmem:[#allocation8 + $0x88] sm:$0xff]
    %v1384 = vld [vmem:[#allocation8 + $0x90] sm:$0xff]
    %v1385 = vld [vmem:[#allocation8 + $0x98] sm:$0xff]
    %v1386 = vld [vmem:[#allocation8 + $0xa0] sm:$0xff]
    %v1387 = vld [vmem:[#allocation8 + $0xa8] sm:$0xff]
    %v1388 = vld [vmem:[#allocation8 + $0xb0] sm:$0xff]
    %v1389 = vld [vmem:[#allocation8 + $0xb8] sm:$0xff]
    %v1390 = vld [vmem:[#allocation8 + $0xc0] sm:$0xff]
    %v1391 = vld [vmem:[#allocation8 + $0xc8] sm:$0xff]
    %v1392 = vld [vmem:[#allocation8 + $0xd0] sm:$0xff]
    %v1393 = vld [vmem:[#allocation8 + $0xd8] sm:$0xff]
    %v1394 = vld [vmem:[#allocation8 + $0xe0] sm:$0xff]
    %v1395 = vld [vmem:[#allocation8 + $0xe8] sm:$0xff]
    %v1396 = vld [vmem:[#allocation8 + $0xf0] sm:$0xff]
    %v1397 = vld [vmem:[#allocation8 + $0xf8] sm:$0xff]
    %v1430 = vunpack.c.l.b16 %v1366
    %v1431 = vunpack.c.h.b16 %v1366
    %v1432 = vunpack.c.l.b16 %v1367
    %v1433 = vunpack.c.h.b16 %v1367
    %v1434 = vunpack.c.l.b16 %v1368
    %v1435 = vunpack.c.h.b16 %v1368
    %v1436 = vunpack.c.l.b16 %v1369
    %v1437 = vunpack.c.h.b16 %v1369
    %v1438 = vunpack.c.l.b16 %v1370
    %v1439 = vunpack.c.h.b16 %v1370
    %v1440 = vunpack.c.l.b16 %v1371
    %v1441 = vunpack.c.h.b16 %v1371
    %v1442 = vunpack.c.l.b16 %v1372
    %v1443 = vunpack.c.h.b16 %v1372
    %v1444 = vunpack.c.l.b16 %v1373
    %v1445 = vunpack.c.h.b16 %v1373
    %v1446 = vunpack.c.l.b16 %v1374
    %v1447 = vunpack.c.h.b16 %v1374
    %v1448 = vunpack.c.l.b16 %v1375
    %v1449 = vunpack.c.h.b16 %v1375
    %v1450 = vunpack.c.l.b16 %v1376
    %v1451 = vunpack.c.h.b16 %v1376
    %v1452 = vunpack.c.l.b16 %v1377
    %v1453 = vunpack.c.h.b16 %v1377
    %v1454 = vunpack.c.l.b16 %v1378
    %v1455 = vunpack.c.h.b16 %v1378
    %v1456 = vunpack.c.l.b16 %v1379
    %v1457 = vunpack.c.h.b16 %v1379
    %v1458 = vunpack.c.l.b16 %v1380
    %v1459 = vunpack.c.h.b16 %v1380
    %v1460 = vunpack.c.l.b16 %v1381
    %v1461 = vunpack.c.h.b16 %v1381
    %v1462 = vunpack.c.l.b16 %v1382
    %v1463 = vunpack.c.h.b16 %v1382
    %v1464 = vunpack.c.l.b16 %v1383
    %v1465 = vunpack.c.h.b16 %v1383
    %v1466 = vunpack.c.l.b16 %v1384
    %v1467 = vunpack.c.h.b16 %v1384
    %v1468 = vunpack.c.l.b16 %v1385
    %v1469 = vunpack.c.h.b16 %v1385
    %v1470 = vunpack.c.l.b16 %v1386
    %v1471 = vunpack.c.h.b16 %v1386
    %v1472 = vunpack.c.l.b16 %v1387
    %v1473 = vunpack.c.h.b16 %v1387
    %v1474 = vunpack.c.l.b16 %v1388
    %v1475 = vunpack.c.h.b16 %v1388
    %v1476 = vunpack.c.l.b16 %v1389
    %v1477 = vunpack.c.h.b16 %v1389
    %v1478 = vunpack.c.l.b16 %v1390
    %v1479 = vunpack.c.h.b16 %v1390
    %v1480 = vunpack.c.l.b16 %v1391
    %v1481 = vunpack.c.h.b16 %v1391
    %v1482 = vunpack.c.l.b16 %v1392
    %v1483 = vunpack.c.h.b16 %v1392
    %v1484 = vunpack.c.l.b16 %v1393
    %v1485 = vunpack.c.h.b16 %v1393
    %v1486 = vunpack.c.l.b16 %v1394
    %v1487 = vunpack.c.h.b16 %v1394
    %v1488 = vunpack.c.l.b16 %v1395
    %v1489 = vunpack.c.h.b16 %v1395
    %v1490 = vunpack.c.l.b16 %v1396
    %v1491 = vunpack.c.h.b16 %v1396
    %v1492 = vunpack.c.l.b16 %v1397
    %v1493 = vunpack.c.h.b16 %v1397
    %v1494 = vpack.c.b16 %v1432, %v1430
    %v1495 = vpack.c.b16 %v1433, %v1431
    %v1496 = vpack.c.b16 %v1436, %v1434
    %v1497 = vpack.c.b16 %v1437, %v1435
    %v1498 = vpack.c.b16 %v1440, %v1438
    %v1499 = vpack.c.b16 %v1441, %v1439
    %v1500 = vpack.c.b16 %v1444, %v1442
    %v1501 = vpack.c.b16 %v1445, %v1443
    %v1502 = vpack.c.b16 %v1448, %v1446
    %v1503 = vpack.c.b16 %v1449, %v1447
    %v1504 = vpack.c.b16 %v1452, %v1450
    %v1505 = vpack.c.b16 %v1453, %v1451
    %v1506 = vpack.c.b16 %v1456, %v1454
    %v1507 = vpack.c.b16 %v1457, %v1455
    %v1508 = vpack.c.b16 %v1460, %v1458
    %v1509 = vpack.c.b16 %v1461, %v1459
    %v1510 = vpack.c.b16 %v1464, %v1462
    %v1511 = vpack.c.b16 %v1465, %v1463
    %v1512 = vpack.c.b16 %v1468, %v1466
    %v1513 = vpack.c.b16 %v1469, %v1467
    %v1514 = vpack.c.b16 %v1472, %v1470
    %v1515 = vpack.c.b16 %v1473, %v1471
    %v1516 = vpack.c.b16 %v1476, %v1474
    %v1517 = vpack.c.b16 %v1477, %v1475
    %v1518 = vpack.c.b16 %v1480, %v1478
    %v1519 = vpack.c.b16 %v1481, %v1479
    %v1520 = vpack.c.b16 %v1484, %v1482
    %v1521 = vpack.c.b16 %v1485, %v1483
    %v1522 = vpack.c.b16 %v1488, %v1486
    %v1523 = vpack.c.b16 %v1489, %v1487
    %v1524 = vpack.c.b16 %v1492, %v1490
    %v1525 = vpack.c.b16 %v1493, %v1491
    %1558 = vmatprep.subr.bf16.mxu0 %v1509
    %1559 = vmatpush1.bf16.msra.mxu0 %v1508
    %1560 = vmatprep.subr.bf16.mxu0 %v1507
    %1561 = vmatpush1.bf16.msra.mxu0 %v1506
    %1562 = vmatprep.subr.bf16.mxu0 %v1505
    %1563 = vmatpush1.bf16.msra.mxu0 %v1504
    %1564 = vmatprep.subr.bf16.mxu0 %v1503
    %1565 = vmatpush1.bf16.msra.mxu0 %v1502
    %1566 = vmatprep.subr.bf16.mxu0 %v1501
    %1567 = vmatpush1.bf16.msra.mxu0 %v1500
    %1568 = vmatprep.subr.bf16.mxu0 %v1499
    %1569 = vmatpush1.bf16.msra.mxu0 %v1498
    %1570 = vmatprep.subr.bf16.mxu0 %v1497
    %1571 = vmatpush1.bf16.msra.mxu0 %v1496
    %1572 = vmatprep.subr.bf16.mxu0 %v1495
    %1573 = vmatpush1.bf16.msra.mxu0 %v1494
    %1574 = vmatprep.subr.bf16.mxu0 %v1525
    %1575 = vmatpush2.bf16.msra.mxu0 %v1524
    %1576 = vmatprep.subr.bf16.mxu0 %v1523
    %1577 = vmatpush2.bf16.msra.mxu0 %v1522
    %1578 = vmatprep.subr.bf16.mxu0 %v1521
    %1579 = vmatpush2.bf16.msra.mxu0 %v1520
    %1580 = vmatprep.subr.bf16.mxu0 %v1519
    %1581 = vmatpush2.bf16.msra.mxu0 %v1518
    %1582 = vmatprep.subr.bf16.mxu0 %v1517
    %1583 = vmatpush2.bf16.msra.mxu0 %v1516
    %1584 = vmatprep.subr.bf16.mxu0 %v1515
    %1585 = vmatpush2.bf16.msra.mxu0 %v1514
    %1586 = vmatprep.subr.bf16.mxu0 %v1513
    %1587 = vmatpush2.bf16.msra.mxu0 %v1512
    %1588 = vmatprep.subr.bf16.mxu0 %v1511
    %1589 = vmatpush2.bf16.msra.mxu0 %v1510
    %1590 = vmatprep.mubr.bf16.mxu0 %v1365
    %1591 = vmatmul.mubr.bf16.gmra.mxu0 %v1364
    %v1592 = vpop.f32.mrf.mxu0
    %v1593 = vadd.f32 0.0, %v1592
    %v1594 = vpop.f32.mrf.mxu0
    %v1595 = vadd.f32 0.0, %v1594
    %v1596 = vpop.f32.mrf.mxu0
    %v1597 = vadd.f32 0.0, %v1596
    %v1598 = vpop.f32.mrf.mxu0
    %v1599 = vadd.f32 0.0, %v1598
    %1600 = vdwg.mxu0
    %v1601 = vadd.f32 %v824, %v1593
    %v1602 = vadd.f32 %v826, %v1595
    %v1603 = vadd.f32 %v828, %v1597
    %v1604 = vadd.f32 %v830, %v1599
    %v1605 = vtanh.pop %v1601
    %v1606 = vtanh.pop %v1602
    %v1607 = vtanh.pop %v1603
    %v1608 = vtanh.pop %v1604
    %v1609 = vsub.f32 %v81, %v1605
    %v1610 = vsub.f32 %v82, %v1606
    %v1611 = vsub.f32 %v83, %v1607
    %v1612 = vsub.f32 %v84, %v1608
    %v1613 = vmul.f32 %v1325, %v1609
    %v1614 = vmul.f32 %v1327, %v1610
    %v1615 = vmul.f32 %v1329, %v1611
    %v1616 = vmul.f32 %v1331, %v1612
    %v1617 = vadd.f32 %v1605, %v1613
    %v1618 = vadd.f32 %v1606, %v1614
    %v1619 = vadd.f32 %v1607, %v1615
    %v1620 = vadd.f32 %v1608, %v1616
    %1621 = vst [vmem:[#allocation10] sm:$0xff] %v1617
    %1622 = vst [vmem:[#allocation10 + $0x8] sm:$0xff] %v1618
    %1623 = vst [vmem:[#allocation10 + $0x10] sm:$0xff] %v1619
    %1624 = vst [vmem:[#allocation10 + $0x18] sm:$0xff] %v1620
    // Predicated region
    $region42: #{tpu_custom_call.1} parent=1 // pred_check
      _
    $region43: #{tpu_custom_call.1} parent=1 // pred_check_branch
      %1626 = sbr.rel (0) target = $region45
    $region44: #{tpu_custom_call.1} parent=1 // pred_region
      %s1628 = ssub.s32 512, 512
      %1629 = vsyncadd [#allocation4], %s1628
      %s1630 = sshll.u32 [#allocation10], 4
      %s1631 = int_to_ptr.vmem [resolvable:$true] %s1630
      %1636 = dma.vmem_to_hbm [thread:$0]  %s1631, 512, %s6, [#allocation4], 256, 256, 16
    $region45: #{tpu_custom_call.1} parent=1 // pred_fallthru
      _
    // Predicated region
    $region46: #{tpu_custom_call.1} parent=1 // pred_check
      _
    $region47: #{tpu_custom_call.1} parent=1 // pred_check_branch
      %1638 = sbr.rel (0) target = $region49
    $region48: #{tpu_custom_call.1} parent=1 // pred_region
      %1639 = dma.done [#allocation4], 512
    $region49: #{tpu_custom_call.1} parent=1 // pred_fallthru
      _
    %1640 = vsyncpa [#allocation3], 1
    %1641 = vsyncpa [#allocation6], 1
    %1642 = vsyncpa [#allocation9], 1
    %1643 = vsyncpa [#allocation4], 1

</llo_original>
